<compile_context>
chip_gen: v6e
topology: v6e:2x2x1
jax: 0.10.0
libtpu: 0.0.40
codegen_flags: <defaults>
</compile_context>

<pallas_src>
import functools

import jax
import jax.numpy as jnp
from jax.experimental import pallas as pl
from jax.experimental.pallas import tpu as pltpu

f32 = jnp.float32
bf16 = jnp.bfloat16


def _round_up(x, m):
    return ((x + m - 1) // m) * m


def _vmem_budget_bytes():
    """Generation-aware scoped-VMEM budget: v7x has 64 MiB/TC, v5e/v6e 128 MiB."""
    cap = 128 * 1024 * 1024
    try:
        info = pltpu.get_tpu_info()
        cap = int(getattr(info, "vmem_capacity_bytes", cap))
    except Exception:
        pass
    if cap <= 64 * 1024 * 1024:
        return 48 * 1024 * 1024     # v7x
    return 96 * 1024 * 1024          # v5e / v6e


_VMEM_BUDGET = _vmem_budget_bytes()


def _pick_tiles(np_):
    """np_ is a multiple of 128.

    Prefer large tiles (amortize per-grid-step overhead), but cap tile_m so
    num_i >= 4 when the padded graph allows it, so both v7x TensorCores get
    destination-row tiles on the "parallel" axis."""
    tile_m = 128
    for cand in (512, 256, 128):
        if np_ % cand == 0 and np_ // cand >= 4:
            tile_m = cand
            break
    tile_k = 128
    for cand in (1024, 512, 256, 128):
        if np_ % cand == 0:
            tile_k = cand
            break
    return tile_m, tile_k


def _pad2(a, rows, cols):
    return jnp.pad(a, ((0, rows - a.shape[0]), (0, cols - a.shape[1])))


def _pad_row(v, cols):
    v = v.reshape(1, -1)
    return jnp.pad(v, ((0, 0), (0, cols - v.shape[1])))


# ----------------------------------------------------------------------------
# Phase 0: XW = X @ W1  (bf16 x bf16 -> f32 acc -> bf16 out)
# ----------------------------------------------------------------------------
def proj_kernel(x_ref, w_ref, o_ref):
    o_ref[...] = jnp.dot(x_ref[...], w_ref[...],
                         preferred_element_type=jnp.float32).astype(o_ref.dtype)


# ----------------------------------------------------------------------------
# Phase 1: HW = relu(LN((A_s @ XW + b1) @ Wfc + bfc)) @ W2, tiled over (i, k)
# XW is either VMEM-resident (full block, sliced with pl.ds) or streamed.
# ----------------------------------------------------------------------------
def gcn1_fused_kernel(a_ref, xw_ref, b1_ref, wfc_ref, bfc_ref,
                      gamma_ref, beta_ref, w2_ref,
                      hw_ref, acc_ref, *, inv_f, tile_k, xw_resident):
    k = pl.program_id(1)

    @pl.when(k == 0)
    def _():
        acc_ref[...] = jnp.zeros_like(acc_ref)

    if xw_resident:
        start = pl.multiple_of(k * tile_k, tile_k)
        xw_blk = xw_ref[pl.ds(start, tile_k), :]
    else:
        xw_blk = xw_ref[...]

    # bf16 x bf16 -> f32 accumulation on the MXU (adjacency-bandwidth bound).
    acc_ref[...] += jnp.dot(a_ref[...], xw_blk, preferred_element_type=jnp.float32)

    @pl.when(k == pl.num_programs(1) - 1)
    def _():
        # Epilogue runs once per row tile (never inside the k reduction loop).
        h = acc_ref[...] + b1_ref[...]
        h = jnp.dot(h.astype(jnp.bfloat16), wfc_ref[...],
                    preferred_element_type=jnp.float32) + bfc_ref[...]

        # LayerNorm over the TRUE out_hid features (padded cols are exactly 0,
        # so sums over the padded width equal sums over the real width).
        s1 = jnp.sum(h, axis=-1, keepdims=True)
        s2 = jnp.sum(h * h, axis=-1, keepdims=True)
        mu = s1 * inv_f
        var = s2 * inv_f - mu * mu
        hn = (h - mu) * jax.lax.rsqrt(var + 1e-5)
        # gamma is zero-padded -> padded feature columns are zeroed here.
        hn = hn * gamma_ref[...] + beta_ref[...]
        hn = jnp.maximum(hn, 0.0)
        # TODO(synk): training-mode dropout would need pltpu.prng_seed/prng_random_bits.

        hw_ref[...] = jnp.dot(hn.astype(jnp.bfloat16), w2_ref[...],
                              preferred_element_type=jnp.float32).astype(hw_ref.dtype)


# ----------------------------------------------------------------------------
# Phase 2: OUT = A_ts @ HW + b2, tiled over (i, k); HW resident or streamed.
# ----------------------------------------------------------------------------
def gcn2_kernel(a_ref, hw_ref, b2_ref, o_ref, acc_ref, *, tile_k, hw_resident):
    k = pl.program_id(1)

    @pl.when(k == 0)
    def _():
        acc_ref[...] = jnp.zeros_like(acc_ref)

    if hw_resident:
        start = pl.multiple_of(k * tile_k, tile_k)
        hw_blk = hw_ref[pl.ds(start, tile_k), :]
    else:
        hw_blk = hw_ref[...]

    acc_ref[...] += jnp.dot(a_ref[...], hw_blk, preferred_element_type=jnp.float32)

    @pl.when(k == pl.num_programs(1) - 1)
    def _():
        o_ref[...] = (acc_ref[...] + b2_ref[...]).astype(o_ref.dtype)


# ----------------------------------------------------------------------------
# Dense symmetric-normalized adjacency (PyG GCNConv gcn_norm semantics), built
# padded to np_ x np_ (padded rows/cols zero), emitted directly in bf16 with a
# single np_^2 temporary (scatter + in-place self-loop add; scale+cast fused).
# ----------------------------------------------------------------------------
def gcn_norm_dense(edge_index, num_nodes, num_nodes_padded):
    src, dst = edge_index[0], edge_index[1]
    a = jnp.zeros((num_nodes_padded, num_nodes_padded), jnp.float32)
    a = a.at[dst, src].add(1.0)
    idx = jnp.arange(num_nodes, dtype=jnp.int32)
    a = a.at[idx, idx].add(1.0)                       # self loops on real nodes
    deg = jnp.sum(a, axis=1)                          # in-degree (+1)
    dinv = jnp.where(deg > 0, jax.lax.rsqrt(deg), 0.0)
    return ((dinv[:, None] * a) * dinv[None, :]).astype(jnp.bfloat16)


# ----------------------------------------------------------------------------
# Forward wrapper: pad -> 3 pallas_calls -> slice.
# ----------------------------------------------------------------------------
@jax.jit
def dysat_gcn_forward(x, edge_index, edge_index_ts, params):
    n, in_hid = x.shape
    out_hid = params["w1"].shape[1]

    np_ = _round_up(n, 128)
    fin_p = _round_up(in_hid, 128)
    f_p = _round_up(out_hid, 128)
    tile_m, tile_k = _pick_tiles(np_)
    num_i, num_k = np_ // tile_m, np_ // tile_k

    # --- padded operands (bf16 on the MXU K-path, f32 for LN / biases) -------
    a_s = gcn_norm_dense(edge_index, n, np_)
    a_ts = gcn_norm_dense(edge_index_ts, n, np_)
    xp = _pad2(x.astype(f32), np_, fin_p).astype(bf16)
    w1p = _pad2(params["w1"], fin_p, f_p).astype(bf16)
    b1p = _pad_row(params["b1"], f_p)
    wfcp = _pad2(params["wfc"], f_p, f_p).astype(bf16)
    bfcp = _pad_row(params["bfc"], f_p)
    gammap = _pad_row(params["gamma"], f_p)   # zero padding is required here
    betap = _pad_row(params["beta"], f_p)
    w2p = _pad2(params["w2"], f_p, f_p).astype(bf16)
    b2p = _pad_row(params["b2"], f_p)

    const1 = pl.Buffered(1)  # single-buffer constant-index operands

    # --- resident XW / HW gating against the per-generation VMEM budget ------
    budget = int(0.8 * _VMEM_BUDGET)

    p1_resident_bytes = (2 * tile_m * tile_k * 2          # A tile (double buf)
                         + np_ * f_p * 2                  # resident XW (single buf)
                         + 2 * f_p * f_p * 2              # Wfc, W2 (bf16, single)
                         + 4 * f_p * 4                    # b1, bfc, gamma, beta
                         + 2 * tile_m * f_p * 2           # hw out (double buf)
                         + tile_m * f_p * 4)              # f32 accumulator
    xw_resident = p1_resident_bytes <= budget

    p2_resident_bytes = (2 * tile_m * tile_k * 2          # A tile
                         + np_ * f_p * 2                  # resident HW
                         + f_p * 4                        # b2
                         + 2 * tile_m * f_p * 4           # out (double buf)
                         + tile_m * f_p * 4)              # f32 accumulator
    hw_resident = p2_resident_bytes <= budget

    cp_1d = pltpu.CompilerParams(dimension_semantics=("parallel",),
                                 vmem_limit_bytes=_VMEM_BUDGET)
    cp_2d = pltpu.CompilerParams(dimension_semantics=("parallel", "arbitrary"),
                                 vmem_limit_bytes=_VMEM_BUDGET)

    # --- phase 0: XW = X @ W1 (bf16 in/out, f32 MXU accumulation) ------------
    xw = pl.pallas_call(
        proj_kernel,
        out_shape=jax.ShapeDtypeStruct((np_, f_p), bf16),
        grid_spec=pltpu.PrefetchScalarGridSpec(
            num_scalar_prefetch=0, grid=(num_i,),
            in_specs=[pl.BlockSpec((tile_m, fin_p), lambda i: (i, 0)),
                      pl.BlockSpec((fin_p, f_p), lambda i: (0, 0),
                                   pipeline_mode=const1)],
            out_specs=pl.BlockSpec((tile_m, f_p), lambda i: (i, 0))),
        compiler_params=cp_1d,
        cost_estimate=pl.CostEstimate(
            flops=int(2 * np_ * fin_p * f_p), transcendentals=0,
            bytes_accessed=int(np_ * fin_p * 2 + fin_p * f_p * 2 + np_ * f_p * 2)),
    )(xp, w1p)

    # --- phase 1: fused GCN#1 + fc + LayerNorm + relu + (@W2) ----------------
    xw_spec = (pl.BlockSpec((np_, f_p), lambda i, k: (0, 0), pipeline_mode=const1)
               if xw_resident else
               pl.BlockSpec((tile_k, f_p), lambda i, k: (k, 0)))
    xw_bytes = np_ * f_p * 2 if xw_resident else num_i * np_ * f_p * 2

    k1 = functools.partial(gcn1_fused_kernel, inv_f=1.0 / float(out_hid),
                           tile_k=tile_k, xw_resident=xw_resident)
    hw = pl.pallas_call(
        k1,
        out_shape=jax.ShapeDtypeStruct((np_, f_p), bf16),
        grid_spec=pltpu.PrefetchScalarGridSpec(
            num_scalar_prefetch=0, grid=(num_i, num_k),
            in_specs=[
                pl.BlockSpec((tile_m, tile_k), lambda i, k: (i, k)),          # A_s
                xw_spec,                                                       # XW
                pl.BlockSpec((1, f_p), lambda i, k: (0, 0),
                             pipeline_mode=const1),                           # b1
                pl.BlockSpec((f_p, f_p), lambda i, k: (0, 0),
                             pipeline_mode=const1),                           # Wfc
                pl.BlockSpec((1, f_p), lambda i, k: (0, 0),
                             pipeline_mode=const1),                           # bfc
                pl.BlockSpec((1, f_p), lambda i, k: (0, 0),
                             pipeline_mode=const1),                           # gamma
                pl.BlockSpec((1, f_p), lambda i, k: (0, 0),
                             pipeline_mode=const1),                           # beta
                pl.BlockSpec((f_p, f_p), lambda i, k: (0, 0),
                             pipeline_mode=const1),                           # W2
            ],
            out_specs=pl.BlockSpec((tile_m, f_p), lambda i, k: (i, 0)),
            scratch_shapes=[pltpu.VMEM((tile_m, f_p), f32)]),
        compiler_params=cp_2d,
        cost_estimate=pl.CostEstimate(
            flops=int(2 * np_ * np_ * f_p + 4 * np_ * f_p * f_p),
            transcendentals=int(np_),
            bytes_accessed=int(np_ * np_ * 2 + xw_bytes + np_ * f_p * 2
                               + 2 * f_p * f_p * 2 + 4 * f_p * 4)),
    )(a_s, xw, b1p, wfcp, bfcp, gammap, betap, w2p)

    # --- phase 2: GCN#2: A_ts @ HW + b2 --------------------------------------
    hw_spec = (pl.BlockSpec((np_, f_p), lambda i, k: (0, 0), pipeline_mode=const1)
               if hw_resident else
               pl.BlockSpec((tile_k, f_p), lambda i, k: (k, 0)))
    hw_bytes = np_ * f_p * 2 if hw_resident else num_i * np_ * f_p * 2

    k2 = functools.partial(gcn2_kernel, tile_k=tile_k, hw_resident=hw_resident)
    out_p = pl.pallas_call(
        k2,
        out_shape=jax.ShapeDtypeStruct((np_, f_p), f32),
        grid_spec=pltpu.PrefetchScalarGridSpec(
            num_scalar_prefetch=0, grid=(num_i, num_k),
            in_specs=[
                pl.BlockSpec((tile_m, tile_k), lambda i, k: (i, k)),          # A_ts
                hw_spec,                                                       # HW
                pl.BlockSpec((1, f_p), lambda i, k: (0, 0),
                             pipeline_mode=const1),                           # b2
            ],
            out_specs=pl.BlockSpec((tile_m, f_p), lambda i, k: (i, 0)),
            scratch_shapes=[pltpu.VMEM((tile_m, f_p), f32)]),
        compiler_params=cp_2d,
        cost_estimate=pl.CostEstimate(
            flops=int(2 * np_ * np_ * f_p), transcendentals=0,
            bytes_accessed=int(np_ * np_ * 2 + hw_bytes + np_ * f_p * 4)),
    )(a_ts, hw, b2p)

    return out_p[:n, :out_hid]


# ----------------------------------------------------------------------------
# Parameter init mirroring the PyTorch module defaults.
# ----------------------------------------------------------------------------
def glorot(key, shape):
    fan_in, fan_out = shape[0], shape[1]
    limit = jnp.sqrt(6.0 / (fan_in + fan_out))
    return jax.random.uniform(key, shape, jnp.float32, -limit, limit)


class GeneralConvPallas:
    """Mirrors GeneralConv(conv_name='dysat-gcn', ...) forward semantics."""

    def __init__(self, conv_name, in_hid, out_hid, n_heads, dropout,
                 num_node_type, num_edge_type, edge_index_ts, key):
        if conv_name != "dysat-gcn":
            raise NotImplementedError("only 'dysat-gcn' path implemented here")
        self.conv_name = conv_name
        self.edge_index_ts = edge_index_ts
        k = jax.random.split(key, 6)
        self.params = {
            # GCNConv(in_hid, out_hid): weight glorot, bias zeros
            "w1": glorot(k[0], (in_hid, out_hid)),
            "b1": jnp.zeros((out_hid,), jnp.float32),
            # nn.Linear(out_hid, out_hid)
            "wfc": glorot(k[1], (out_hid, out_hid)),
            "bfc": jax.random.uniform(k[2], (out_hid,), jnp.float32,
                                      -1.0 / jnp.sqrt(out_hid),
                                      1.0 / jnp.sqrt(out_hid)),
            # LayerNorm(out_hid)
            "gamma": jnp.ones((out_hid,), jnp.float32),
            "beta": jnp.zeros((out_hid,), jnp.float32),
            # GCNConv(out_hid, out_hid)
            "w2": glorot(k[3], (out_hid, out_hid)),
            "b2": jnp.zeros((out_hid,), jnp.float32),
        }

    def __call__(self, x, edge_index, node_type=None, edge_type=None, *args):
        return dysat_gcn_forward(x, edge_index, self.edge_index_ts, self.params)


# ----------------------------------------------------------------------------
# Pure-JAX reference mirroring the kernel's numerics (bf16 adjacency / weights /
# streamed intermediates, f32 accumulation, E[x^2]-mu^2 LayerNorm).
# ----------------------------------------------------------------------------
def reference(a_s, a_ts, x, p):
    xw = jnp.dot(x.astype(bf16), p["w1"].astype(bf16),
                 preferred_element_type=f32).astype(bf16)
    h = jnp.dot(a_s.astype(bf16), xw, preferred_element_type=f32) + p["b1"]
    h = jnp.dot(h.astype(bf16), p["wfc"].astype(bf16),
                preferred_element_type=f32) + p["bfc"]
    mu = h.mean(-1, keepdims=True)
    var = (h * h).mean(-1, keepdims=True) - mu * mu
    hn = (h - mu) * jax.lax.rsqrt(var + 1e-5)
    hn = hn * p["gamma"] + p["beta"]
    hn = jnp.maximum(hn, 0.0)
    hw = jnp.dot(hn.astype(bf16), p["w2"].astype(bf16),
                 preferred_element_type=f32).astype(bf16)
    return jnp.dot(a_ts.astype(bf16), hw, preferred_element_type=f32) + p["b2"]


if __name__ == "__main__":
    key = jax.random.PRNGKey(0)
    k_x, k_e, k_et, k_p = jax.random.split(key, 4)

    N, IN_HID, OUT_HID = 16, 32, 32
    N_EDGES, N_EDGES_TS = 48, 32

    x = jax.random.normal(k_x, (N, IN_HID), jnp.float32)
    edge_index = jax.random.randint(k_e, (2, N_EDGES), 0, N, jnp.int32)
    edge_index_ts = jax.random.randint(k_et, (2, N_EDGES_TS), 0, N, jnp.int32)

    conv = GeneralConvPallas(
        conv_name="dysat-gcn", in_hid=IN_HID, out_hid=OUT_HID, n_heads=4,
        dropout=0.2, num_node_type=3, num_edge_type=3,
        edge_index_ts=edge_index_ts, key=k_p)

    out = conv(x, edge_index, node_type=None, edge_type=None)
    out = jax.block_until_ready(out)

    # sanity check vs pure-JAX reference (same bf16 casts / f32 accumulation)
    a_s = gcn_norm_dense(edge_index, N, N)
    a_ts = gcn_norm_dense(edge_index_ts, N, N)
    ref = reference(a_s, a_ts, x, conv.params)
    assert out.shape == (N, OUT_HID)
    assert jnp.allclose(out, ref, atol=3e-3, rtol=3e-3), "mismatch vs reference"

    print("KERNEL_OK")
</pallas_src>

<mosaic_0001>
module attributes {stable_mosaic.version = 11 : i64} {
  func.func private @main(%arg0: i32) attributes {dimension_semantics = [#tpu.dimension_semantics<core_parallel>], iteration_bounds = array<i64: 2>, tpu.core_type = #tpu.core_type<sc_scalar_subcore>, window_params = []} {
    return
  }
}

module attributes {stable_mosaic.version = 11 : i64} {
  func.func private @main(%arg0: i32) attributes {dimension_semantics = [#tpu.dimension_semantics<core_parallel>], iteration_bounds = array<i64: 2>, tpu.core_type = #tpu.core_type<sc_scalar_subcore>, window_params = []} {
    return
  }
}

module attributes {stable_mosaic.version = 11 : i64} {
  func.func @proj_kernel(%arg0: i32, %arg1: memref<128x128xbf16, #tpu.memory_space<vmem>>, %arg2: memref<128x128xbf16, #tpu.memory_space<vmem>>, %arg3: memref<128x128xbf16, #tpu.memory_space<vmem>>) attributes {dimension_semantics = [#tpu.dimension_semantics<parallel>], iteration_bounds = array<i64: 1>, scalar_prefetch = 0 : i64, scratch_operands = 0 : i64, tpu.core_type = #tpu.core_type<tc>, window_params = [{transform_indices = @transform_0, window_bounds = array<i64: 128, 128>}, {pipeline_mode = #tpu.pipeline_mode<synchronous>, transform_indices = @transform_1, window_bounds = array<i64: 128, 128>}, {transform_indices = @transform_2, window_bounds = array<i64: 128, 128>}]} {
    %c0 = arith.constant 0 : index
    %c0_0 = arith.constant 0 : index
    %0 = vector.load %arg1[%c0, %c0_0] : memref<128x128xbf16, #tpu.memory_space<vmem>>, vector<128x128xbf16>
    %c0_1 = arith.constant 0 : index
    %c0_2 = arith.constant 0 : index
    %1 = vector.load %arg2[%c0_1, %c0_2] : memref<128x128xbf16, #tpu.memory_space<vmem>>, vector<128x128xbf16>
    %cst = arith.constant dense<0.000000e+00> : vector<128x128xf32>
    %2 = tpu.matmul %0, %1, %cst {dimension_numbers = #tpu.dot_dimension_numbers<[1], [0], [0], [1], [0, 0, 1, 1], [], []>} : vector<128x128xbf16>, vector<128x128xbf16>, vector<128x128xf32> -> vector<128x128xf32>
    %3 = arith.truncf %2 : vector<128x128xf32> to vector<128x128xbf16>
    %c0_3 = arith.constant 0 : index
    %c0_4 = arith.constant 0 : index
    %4 = vector.load %arg3[%c0_3, %c0_4] : memref<128x128xbf16, #tpu.memory_space<vmem>>, vector<128x128xbf16>
    tpu.vector_store %arg3[%c0_3, %c0_4], %3 {strides = array<i32>} : memref<128x128xbf16, #tpu.memory_space<vmem>>, vector<128x128xbf16>,
    return
  }
  func.func @transform_0(%arg0: i32) -> (i32, i32) {
    %c0_i32 = arith.constant 0 : i32
    %c0_i32_0 = arith.constant 0 : i32
    return %arg0, %c0_i32 : i32, i32
  }
  func.func @transform_1(%arg0: i32) -> (i32, i32) {
    %c0_i32 = arith.constant 0 : i32
    %c0_i32_0 = arith.constant 0 : i32
    %c0_i32_1 = arith.constant 0 : i32
    return %c0_i32, %c0_i32_0 : i32, i32
  }
  func.func @transform_2(%arg0: i32) -> (i32, i32) {
    %c0_i32 = arith.constant 0 : i32
    %c0_i32_0 = arith.constant 0 : i32
    return %arg0, %c0_i32 : i32, i32
  }
}

module attributes {stable_mosaic.version = 11 : i64} {
  func.func @gcn2_kernel(%arg0: i32, %arg1: i32, %arg2: memref<128x128xbf16, #tpu.memory_space<vmem>>, %arg3: memref<128x128xbf16, #tpu.memory_space<vmem>>, %arg4: memref<1x128xf32, #tpu.memory_space<vmem>>, %arg5: memref<128x128xf32, #tpu.memory_space<vmem>>, %arg6: memref<128x128xf32, #tpu.memory_space<vmem>>) attributes {dimension_semantics = [#tpu.dimension_semantics<parallel>, #tpu.dimension_semantics<arbitrary>], iteration_bounds = array<i64: 1, 1>, scalar_prefetch = 0 : i64, scratch_operands = 1 : i64, tpu.core_type = #tpu.core_type<tc>, window_params = [{transform_indices = @transform_0, window_bounds = array<i64: 128, 128>}, {pipeline_mode = #tpu.pipeline_mode<synchronous>, transform_indices = @transform_1, window_bounds = array<i64: 128, 128>}, {pipeline_mode = #tpu.pipeline_mode<synchronous>, transform_indices = @transform_2, window_bounds = array<i64: 1, 128>}, {transform_indices = @transform_3, window_bounds = array<i64: 128, 128>}]} {
    %c0_i32 = arith.constant 0 : i32
    %0 = arith.cmpi eq, %arg1, %c0_i32 : i32
    %1 = arith.extui %0 : i1 to i32
    %c0_i32_0 = arith.constant 0 : i32
    %2 = arith.cmpi ne, %1, %c0_i32_0 : i32
    scf.if %2 {
      %cst_9 = arith.constant 0.000000e+00 : f32
      %15 = vector.broadcast %cst_9 : f32 to vector<128x128xf32>
      %c0_10 = arith.constant 0 : index
      %c0_11 = arith.constant 0 : index
      %16 = vector.load %arg6[%c0_10, %c0_11] : memref<128x128xf32, #tpu.memory_space<vmem>>, vector<128x128xf32>
      tpu.vector_store %arg6[%c0_10, %c0_11], %15 {strides = array<i32>} : memref<128x128xf32, #tpu.memory_space<vmem>>, vector<128x128xf32>,
    } else {
    }
    %c128_i32 = arith.constant 128 : i32
    %3 = arith.muli %arg1, %c128_i32 : i32
    %4 = tpu.assume_multiple %3, 128 : i32
    %5 = arith.index_cast %4 : i32 to index
    %c0 = arith.constant 0 : index
    %6 = vector.load %arg3[%5, %c0] : memref<128x128xbf16, #tpu.memory_space<vmem>>, vector<128x128xbf16>
    %c0_1 = arith.constant 0 : index
    %c0_2 = arith.constant 0 : index
    %7 = vector.load %arg6[%c0_1, %c0_2] : memref<128x128xf32, #tpu.memory_space<vmem>>, vector<128x128xf32>
    %c0_3 = arith.constant 0 : index
    %c0_4 = arith.constant 0 : index
    %8 = vector.load %arg2[%c0_3, %c0_4] : memref<128x128xbf16, #tpu.memory_space<vmem>>, vector<128x128xbf16>
    %cst = arith.constant dense<0.000000e+00> : vector<128x128xf32>
    %9 = tpu.matmul %8, %6, %cst {dimension_numbers = #tpu.dot_dimension_numbers<[1], [0], [0], [1], [0, 0, 1, 1], [], []>} : vector<128x128xbf16>, vector<128x128xbf16>, vector<128x128xf32> -> vector<128x128xf32>
    %10 = arith.addf %7, %9 : vector<128x128xf32>
    %c0_5 = arith.constant 0 : index
    %c0_6 = arith.constant 0 : index
    %11 = vector.load %arg6[%c0_5, %c0_6] : memref<128x128xf32, #tpu.memory_space<vmem>>, vector<128x128xf32>
    tpu.vector_store %arg6[%c0_5, %c0_6], %10 {strides = array<i32>} : memref<128x128xf32, #tpu.memory_space<vmem>>, vector<128x128xf32>,
    %c0_i32_7 = arith.constant 0 : i32
    %12 = arith.cmpi eq, %arg1, %c0_i32_7 : i32
    %13 = arith.extui %12 : i1 to i32
    %c0_i32_8 = arith.constant 0 : i32
    %14 = arith.cmpi ne, %13, %c0_i32_8 : i32
    scf.if %14 {
      %c0_9 = arith.constant 0 : index
      %c0_10 = arith.constant 0 : index
      %15 = vector.load %arg6[%c0_9, %c0_10] : memref<128x128xf32, #tpu.memory_space<vmem>>, vector<128x128xf32>
      %c0_11 = arith.constant 0 : index
      %c0_12 = arith.constant 0 : index
      %16 = vector.load %arg4[%c0_11, %c0_12] : memref<1x128xf32, #tpu.memory_space<vmem>>, vector<1x128xf32>
      %17 = vector.broadcast %16 : vector<1x128xf32> to vector<128x128xf32>
      %18 = arith.addf %15, %17 : vector<128x128xf32>
      %c0_13 = arith.constant 0 : index
      %c0_14 = arith.constant 0 : index
      %19 = vector.load %arg5[%c0_13, %c0_14] : memref<128x128xf32, #tpu.memory_space<vmem>>, vector<128x128xf32>
      tpu.vector_store %arg5[%c0_13, %c0_14], %18 {strides = array<i32>} : memref<128x128xf32, #tpu.memory_space<vmem>>, vector<128x128xf32>,
    } else {
    }
    return
  }
  func.func @transform_0(%arg0: i32, %arg1: i32) -> (i32, i32) {
    %c0_i32 = arith.constant 0 : i32
    return %arg0, %arg1 : i32, i32
  }
  func.func @transform_1(%arg0: i32, %arg1: i32) -> (i32, i32) {
    %c0_i32 = arith.constant 0 : i32
    %c0_i32_0 = arith.constant 0 : i32
    %c0_i32_1 = arith.constant 0 : i32
    return %c0_i32, %c0_i32_0 : i32, i32
  }
  func.func @transform_2(%arg0: i32, %arg1: i32) -> (i32, i32) {
    %c0_i32 = arith.constant 0 : i32
    %c0_i32_0 = arith.constant 0 : i32
    %c0_i32_1 = arith.constant 0 : i32
    return %c0_i32, %c0_i32_0 : i32, i32
  }
  func.func @transform_3(%arg0: i32, %arg1: i32) -> (i32, i32) {
    %c0_i32 = arith.constant 0 : i32
    %c0_i32_0 = arith.constant 0 : i32
    return %arg0, %c0_i32 : i32, i32
  }
}

module attributes {stable_mosaic.version = 11 : i64} {
  func.func @gcn1_fused_kernel(%arg0: i32, %arg1: i32, %arg2: memref<128x128xbf16, #tpu.memory_space<vmem>>, %arg3: memref<128x128xbf16, #tpu.memory_space<vmem>>, %arg4: memref<1x128xf32, #tpu.memory_space<vmem>>, %arg5: memref<128x128xbf16, #tpu.memory_space<vmem>>, %arg6: memref<1x128xf32, #tpu.memory_space<vmem>>, %arg7: memref<1x128xf32, #tpu.memory_space<vmem>>, %arg8: memref<1x128xf32, #tpu.memory_space<vmem>>, %arg9: memref<128x128xbf16, #tpu.memory_space<vmem>>, %arg10: memref<128x128xbf16, #tpu.memory_space<vmem>>, %arg11: memref<128x128xf32, #tpu.memory_space<vmem>>) attributes {dimension_semantics = [#tpu.dimension_semantics<parallel>, #tpu.dimension_semantics<arbitrary>], iteration_bounds = array<i64: 1, 1>, scalar_prefetch = 0 : i64, scratch_operands = 1 : i64, tpu.core_type = #tpu.core_type<tc>, window_params = [{transform_indices = @transform_0, window_bounds = array<i64: 128, 128>}, {pipeline_mode = #tpu.pipeline_mode<synchronous>, transform_indices = @transform_1, window_bounds = array<i64: 128, 128>}, {pipeline_mode = #tpu.pipeline_mode<synchronous>, transform_indices = @transform_2, window_bounds = array<i64: 1, 128>}, {pipeline_mode = #tpu.pipeline_mode<synchronous>, transform_indices = @transform_3, window_bounds = array<i64: 128, 128>}, {pipeline_mode = #tpu.pipeline_mode<synchronous>, transform_indices = @transform_4, window_bounds = array<i64: 1, 128>}, {pipeline_mode = #tpu.pipeline_mode<synchronous>, transform_indices = @transform_5, window_bounds = array<i64: 1, 128>}, {pipeline_mode = #tpu.pipeline_mode<synchronous>, transform_indices = @transform_6, window_bounds = array<i64: 1, 128>}, {pipeline_mode = #tpu.pipeline_mode<synchronous>, transform_indices = @transform_7, window_bounds = array<i64: 128, 128>}, {transform_indices = @transform_8, window_bounds = array<i64: 128, 128>}]} {
    %c0_i32 = arith.constant 0 : i32
    %0 = arith.cmpi eq, %arg1, %c0_i32 : i32
    %1 = arith.extui %0 : i1 to i32
    %c0_i32_0 = arith.constant 0 : i32
    %2 = arith.cmpi ne, %1, %c0_i32_0 : i32
    scf.if %2 {
      %cst_9 = arith.constant 0.000000e+00 : f32
      %15 = vector.broadcast %cst_9 : f32 to vector<128x128xf32>
      %c0_10 = arith.constant 0 : index
      %c0_11 = arith.constant 0 : index
      %16 = vector.load %arg11[%c0_10, %c0_11] : memref<128x128xf32, #tpu.memory_space<vmem>>, vector<128x128xf32>
      tpu.vector_store %arg11[%c0_10, %c0_11], %15 {strides = array<i32>} : memref<128x128xf32, #tpu.memory_space<vmem>>, vector<128x128xf32>,
    } else {
    }
    %c128_i32 = arith.constant 128 : i32
    %3 = arith.muli %arg1, %c128_i32 : i32
    %4 = tpu.assume_multiple %3, 128 : i32
    %5 = arith.index_cast %4 : i32 to index
    %c0 = arith.constant 0 : index
    %6 = vector.load %arg3[%5, %c0] : memref<128x128xbf16, #tpu.memory_space<vmem>>, vector<128x128xbf16>
    %c0_1 = arith.constant 0 : index
    %c0_2 = arith.constant 0 : index
    %7 = vector.load %arg11[%c0_1, %c0_2] : memref<128x128xf32, #tpu.memory_space<vmem>>, vector<128x128xf32>
    %c0_3 = arith.constant 0 : index
    %c0_4 = arith.constant 0 : index
    %8 = vector.load %arg2[%c0_3, %c0_4] : memref<128x128xbf16, #tpu.memory_space<vmem>>, vector<128x128xbf16>
    %cst = arith.constant dense<0.000000e+00> : vector<128x128xf32>
    %9 = tpu.matmul %8, %6, %cst {dimension_numbers = #tpu.dot_dimension_numbers<[1], [0], [0], [1], [0, 0, 1, 1], [], []>} : vector<128x128xbf16>, vector<128x128xbf16>, vector<128x128xf32> -> vector<128x128xf32>
    %10 = arith.addf %7, %9 : vector<128x128xf32>
    %c0_5 = arith.constant 0 : index
    %c0_6 = arith.constant 0 : index
    %11 = vector.load %arg11[%c0_5, %c0_6] : memref<128x128xf32, #tpu.memory_space<vmem>>, vector<128x128xf32>
    tpu.vector_store %arg11[%c0_5, %c0_6], %10 {strides = array<i32>} : memref<128x128xf32, #tpu.memory_space<vmem>>, vector<128x128xf32>,
    %c0_i32_7 = arith.constant 0 : i32
    %12 = arith.cmpi eq, %arg1, %c0_i32_7 : i32
    %13 = arith.extui %12 : i1 to i32
    %c0_i32_8 = arith.constant 0 : i32
    %14 = arith.cmpi ne, %13, %c0_i32_8 : i32
    scf.if %14 {
      %c0_9 = arith.constant 0 : index
      %c0_10 = arith.constant 0 : index
      %15 = vector.load %arg11[%c0_9, %c0_10] : memref<128x128xf32, #tpu.memory_space<vmem>>, vector<128x128xf32>
      %c0_11 = arith.constant 0 : index
      %c0_12 = arith.constant 0 : index
      %16 = vector.load %arg4[%c0_11, %c0_12] : memref<1x128xf32, #tpu.memory_space<vmem>>, vector<1x128xf32>
      %17 = vector.broadcast %16 : vector<1x128xf32> to vector<128x128xf32>
      %18 = arith.addf %15, %17 : vector<128x128xf32>
      %19 = arith.truncf %18 : vector<128x128xf32> to vector<128x128xbf16>
      %c0_13 = arith.constant 0 : index
      %c0_14 = arith.constant 0 : index
      %20 = vector.load %arg5[%c0_13, %c0_14] : memref<128x128xbf16, #tpu.memory_space<vmem>>, vector<128x128xbf16>
      %cst_15 = arith.constant dense<0.000000e+00> : vector<128x128xf32>
      %21 = tpu.matmul %19, %20, %cst_15 {dimension_numbers = #tpu.dot_dimension_numbers<[1], [0], [0], [1], [0, 0, 1, 1], [], []>} : vector<128x128xbf16>, vector<128x128xbf16>, vector<128x128xf32> -> vector<128x128xf32>
      %c0_16 = arith.constant 0 : index
      %c0_17 = arith.constant 0 : index
      %22 = vector.load %arg6[%c0_16, %c0_17] : memref<1x128xf32, #tpu.memory_space<vmem>>, vector<1x128xf32>
      %23 = vector.broadcast %22 : vector<1x128xf32> to vector<128x128xf32>
      %24 = arith.addf %21, %23 : vector<128x128xf32>
      %cst_18 = arith.constant dense<0.000000e+00> : vector<128xf32>
      %25 = vector.multi_reduction <add>, %24, %cst_18 [1] : vector<128x128xf32> to vector<128xf32>
      %26 = vector.shape_cast %25 : vector<128xf32> to vector<128x1xf32>
      %27 = arith.mulf %24, %24 : vector<128x128xf32>
      %cst_19 = arith.constant dense<0.000000e+00> : vector<128xf32>
      %28 = vector.multi_reduction <add>, %27, %cst_19 [1] : vector<128x128xf32> to vector<128xf32>
      %29 = vector.shape_cast %28 : vector<128xf32> to vector<128x1xf32>
      %cst_20 = arith.constant 3.125000e-02 : f32
      %30 = vector.broadcast %cst_20 : f32 to vector<128x1xf32>
      %31 = arith.mulf %26, %30 : vector<128x1xf32>
      %cst_21 = arith.constant 3.125000e-02 : f32
      %32 = vector.broadcast %cst_21 : f32 to vector<128x1xf32>
      %33 = arith.mulf %29, %32 : vector<128x1xf32>
      %34 = arith.mulf %31, %31 : vector<128x1xf32>
      %35 = arith.subf %33, %34 : vector<128x1xf32>
      %36 = vector.broadcast %31 : vector<128x1xf32> to vector<128x128xf32>
      %37 = arith.subf %24, %36 : vector<128x128xf32>
      %cst_22 = arith.constant 9.99999974E-6 : f32
      %38 = vector.broadcast %cst_22 : f32 to vector<128x1xf32>
      %39 = arith.addf %35, %38 : vector<128x1xf32>
      %40 = math.rsqrt %39 : vector<128x1xf32>
      %41 = vector.broadcast %40 : vector<128x1xf32> to vector<128x128xf32>
      %42 = arith.mulf %37, %41 : vector<128x128xf32>
      %c0_23 = arith.constant 0 : index
      %c0_24 = arith.constant 0 : index
      %43 = vector.load %arg7[%c0_23, %c0_24] : memref<1x128xf32, #tpu.memory_space<vmem>>, vector<1x128xf32>
      %44 = vector.broadcast %43 : vector<1x128xf32> to vector<128x128xf32>
      %45 = arith.mulf %42, %44 : vector<128x128xf32>
      %c0_25 = arith.constant 0 : index
      %c0_26 = arith.constant 0 : index
      %46 = vector.load %arg8[%c0_25, %c0_26] : memref<1x128xf32, #tpu.memory_space<vmem>>, vector<1x128xf32>
      %47 = vector.broadcast %46 : vector<1x128xf32> to vector<128x128xf32>
      %48 = arith.addf %45, %47 : vector<128x128xf32>
      %cst_27 = arith.constant 0.000000e+00 : f32
      %49 = vector.broadcast %cst_27 : f32 to vector<128x128xf32>
      %50 = arith.maximumf %48, %49 : vector<128x128xf32>
      %51 = arith.truncf %50 : vector<128x128xf32> to vector<128x128xbf16>
      %c0_28 = arith.constant 0 : index
      %c0_29 = arith.constant 0 : index
      %52 = vector.load %arg9[%c0_28, %c0_29] : memref<128x128xbf16, #tpu.memory_space<vmem>>, vector<128x128xbf16>
      %cst_30 = arith.constant dense<0.000000e+00> : vector<128x128xf32>
      %53 = tpu.matmul %51, %52, %cst_30 {dimension_numbers = #tpu.dot_dimension_numbers<[1], [0], [0], [1], [0, 0, 1, 1], [], []>} : vector<128x128xbf16>, vector<128x128xbf16>, vector<128x128xf32> -> vector<128x128xf32>
      %54 = arith.truncf %53 : vector<128x128xf32> to vector<128x128xbf16>
      %c0_31 = arith.constant 0 : index
      %c0_32 = arith.constant 0 : index
      %55 = vector.load %arg10[%c0_31, %c0_32] : memref<128x128xbf16, #tpu.memory_space<vmem>>, vector<128x128xbf16>
      tpu.vector_store %arg10[%c0_31, %c0_32], %54 {strides = array<i32>} : memref<128x128xbf16, #tpu.memory_space<vmem>>, vector<128x128xbf16>,
    } else {
    }
    return
  }
  func.func @transform_0(%arg0: i32, %arg1: i32) -> (i32, i32) {
    %c0_i32 = arith.constant 0 : i32
    return %arg0, %arg1 : i32, i32
  }
  func.func @transform_1(%arg0: i32, %arg1: i32) -> (i32, i32) {
    %c0_i32 = arith.constant 0 : i32
    %c0_i32_0 = arith.constant 0 : i32
    %c0_i32_1 = arith.constant 0 : i32
    return %c0_i32, %c0_i32_0 : i32, i32
  }
  func.func @transform_2(%arg0: i32, %arg1: i32) -> (i32, i32) {
    %c0_i32 = arith.constant 0 : i32
    %c0_i32_0 = arith.constant 0 : i32
    %c0_i32_1 = arith.constant 0 : i32
    return %c0_i32, %c0_i32_0 : i32, i32
  }
  func.func @transform_3(%arg0: i32, %arg1: i32) -> (i32, i32) {
    %c0_i32 = arith.constant 0 : i32
    %c0_i32_0 = arith.constant 0 : i32
    %c0_i32_1 = arith.constant 0 : i32
    return %c0_i32, %c0_i32_0 : i32, i32
  }
  func.func @transform_4(%arg0: i32, %arg1: i32) -> (i32, i32) {
    %c0_i32 = arith.constant 0 : i32
    %c0_i32_0 = arith.constant 0 : i32
    %c0_i32_1 = arith.constant 0 : i32
    return %c0_i32, %c0_i32_0 : i32, i32
  }
  func.func @transform_5(%arg0: i32, %arg1: i32) -> (i32, i32) {
    %c0_i32 = arith.constant 0 : i32
    %c0_i32_0 = arith.constant 0 : i32
    %c0_i32_1 = arith.constant 0 : i32
    return %c0_i32, %c0_i32_0 : i32, i32
  }
  func.func @transform_6(%arg0: i32, %arg1: i32) -> (i32, i32) {
    %c0_i32 = arith.constant 0 : i32
    %c0_i32_0 = arith.constant 0 : i32
    %c0_i32_1 = arith.constant 0 : i32
    return %c0_i32, %c0_i32_0 : i32, i32
  }
  func.func @transform_7(%arg0: i32, %arg1: i32) -> (i32, i32) {
    %c0_i32 = arith.constant 0 : i32
    %c0_i32_0 = arith.constant 0 : i32
    %c0_i32_1 = arith.constant 0 : i32
    return %c0_i32, %c0_i32_0 : i32, i32
  }
  func.func @transform_8(%arg0: i32, %arg1: i32) -> (i32, i32) {
    %c0_i32 = arith.constant 0 : i32
    %c0_i32_0 = arith.constant 0 : i32
    return %arg0, %c0_i32 : i32, i32
  }
}

</mosaic_0001>

<llo_original>
// kernel: dysat_gcn_forward.3
$region0: #{dysat_gcn_forward.3}
  #allocation0 [shape = 'u32[]', space=smem, size = 0x4, offset = 0x4, fixed_abs, tag = 'smem constant byte address 0x4 - core index']
  #allocation1 [shape = 'u32[144,128]{1,0:T(1,128)}', space=vmem, size = 0x12000, scoped, tag = 'internal scratch']
  %s0 = inlined_call_operand.vmem [shape: bf16[128,128], index: 0, kind: input, shape index: {}]
  %s1 = inlined_call_operand.vmem [shape: bf16[128,128], index: 1, kind: input, shape index: {}]
  %s2 = inlined_call_operand.vmem [shape: bf16[128,128], index: 2, kind: output, shape index: {}]
  %s3 = sld [smem:[#allocation0]]
  $region18: #{dysat_gcn_forward.3} parent=0
    _
  %s5 = ssub.s32 1, %s3
  %s6 = scalar_select 0, %s5, %s3
  // Predicated region
  $region2: #{dysat_gcn_forward.3} parent=0 // pred_check
    _
  $region3: #{dysat_gcn_forward.3} parent=0 // pred_check_branch
    %8 = sbr.rel (0) target = $region5
  $region4: #{dysat_gcn_forward.3} parent=0 // pred_region
    _
  $region5: #{dysat_gcn_forward.3} parent=0 // pred_fallthru
    _
  // Predicated region
  $region6: #{dysat_gcn_forward.3} parent=0 // pred_check
    _
  $region7: #{dysat_gcn_forward.3} parent=0 // pred_check_branch
    %10 = sbr.rel (0) target = $region9
  $region8: #{dysat_gcn_forward.3} parent=0 // pred_region
    _
  $region9: #{dysat_gcn_forward.3} parent=0 // pred_fallthru
    _
  %v12 = vld [vmem:[%s0] sm:$0xf]
  %v13 = vld [vmem:[%s0 + $0x4] sm:$0xf]
  %v14 = vld [vmem:[%s0 + $0x8] sm:$0xf]
  %v15 = vld [vmem:[%s0 + $0xc] sm:$0xf]
  %v16 = vld [vmem:[%s0 + $0x10] sm:$0xf]
  %v17 = vld [vmem:[%s0 + $0x14] sm:$0xf]
  %v18 = vld [vmem:[%s0 + $0x18] sm:$0xf]
  %v19 = vld [vmem:[%s0 + $0x1c] sm:$0xf]
  %v20 = vld [vmem:[%s0 + $0x20] sm:$0xf]
  %v21 = vld [vmem:[%s0 + $0x24] sm:$0xf]
  %v22 = vld [vmem:[%s0 + $0x28] sm:$0xf]
  %v23 = vld [vmem:[%s0 + $0x2c] sm:$0xf]
  %v24 = vld [vmem:[%s0 + $0x30] sm:$0xf]
  %v25 = vld [vmem:[%s0 + $0x34] sm:$0xf]
  %v26 = vld [vmem:[%s0 + $0x38] sm:$0xf]
  %v27 = vld [vmem:[%s0 + $0x3c] sm:$0xf]
  %v28 = vld [vmem:[%s1] sm:$0xf]
  %v29 = vld [vmem:[%s1 + $0x4] sm:$0xf]
  %v30 = vld [vmem:[%s1 + $0x8] sm:$0xf]
  %v31 = vld [vmem:[%s1 + $0xc] sm:$0xf]
  %v32 = vld [vmem:[%s1 + $0x10] sm:$0xf]
  %v33 = vld [vmem:[%s1 + $0x14] sm:$0xf]
  %v34 = vld [vmem:[%s1 + $0x18] sm:$0xf]
  %v35 = vld [vmem:[%s1 + $0x1c] sm:$0xf]
  %v36 = vld [vmem:[%s1 + $0x20] sm:$0xf]
  %v37 = vld [vmem:[%s1 + $0x24] sm:$0xf]
  %v38 = vld [vmem:[%s1 + $0x28] sm:$0xf]
  %v39 = vld [vmem:[%s1 + $0x2c] sm:$0xf]
  %v40 = vld [vmem:[%s1 + $0x30] sm:$0xf]
  %v41 = vld [vmem:[%s1 + $0x34] sm:$0xf]
  %v42 = vld [vmem:[%s1 + $0x38] sm:$0xf]
  %v43 = vld [vmem:[%s1 + $0x3c] sm:$0xf]
  %v60 = vunpack.c.l.b16 %v12
  %v61 = vunpack.c.l.b16 %v13
  %v62 = vunpack.c.l.b16 %v14
  %v63 = vunpack.c.l.b16 %v15
  %v64 = vunpack.c.l.b16 %v16
  %v65 = vunpack.c.l.b16 %v17
  %v66 = vunpack.c.l.b16 %v18
  %v67 = vunpack.c.l.b16 %v19
  %v68 = vunpack.c.l.b16 %v20
  %v69 = vunpack.c.l.b16 %v21
  %v70 = vunpack.c.l.b16 %v22
  %v71 = vunpack.c.l.b16 %v23
  %v72 = vunpack.c.l.b16 %v24
  %v73 = vunpack.c.l.b16 %v25
  %v74 = vunpack.c.l.b16 %v26
  %v75 = vunpack.c.l.b16 %v27
  %v76 = vpack.c.b16 %v61, %v60
  %v77 = vpack.c.b16 %v63, %v62
  %v78 = vpack.c.b16 %v65, %v64
  %v79 = vpack.c.b16 %v67, %v66
  %v80 = vpack.c.b16 %v69, %v68
  %v81 = vpack.c.b16 %v71, %v70
  %v82 = vpack.c.b16 %v73, %v72
  %v83 = vpack.c.b16 %v75, %v74
  %v108 = vunpack.c.l.b16 %v28
  %v109 = vunpack.c.l.b16 %v29
  %v110 = vunpack.c.l.b16 %v30
  %v111 = vunpack.c.l.b16 %v31
  %v112 = vunpack.c.l.b16 %v32
  %v113 = vunpack.c.l.b16 %v33
  %v114 = vunpack.c.l.b16 %v34
  %v115 = vunpack.c.l.b16 %v35
  %v116 = vunpack.c.l.b16 %v36
  %v117 = vunpack.c.l.b16 %v37
  %v118 = vunpack.c.l.b16 %v38
  %v119 = vunpack.c.l.b16 %v39
  %v120 = vunpack.c.l.b16 %v40
  %v121 = vunpack.c.l.b16 %v41
  %v122 = vunpack.c.l.b16 %v42
  %v123 = vunpack.c.l.b16 %v43
  %v124 = vpack.c.b16 %v109, %v108
  %v125 = vpack.c.b16 %v111, %v110
  %v126 = vpack.c.b16 %v113, %v112
  %v127 = vpack.c.b16 %v115, %v114
  %v128 = vpack.c.b16 %v117, %v116
  %v129 = vpack.c.b16 %v119, %v118
  %v130 = vpack.c.b16 %v121, %v120
  %v131 = vpack.c.b16 %v123, %v122
  %140 = vmatprep.subr.bf16.mxu0 0
  %141 = vmatpush1.bf16.msra.mxu0 %v131
  %142 = vmatprep.subr.bf16.mxu0 0
  %143 = vmatpush1.bf16.msra.mxu0 %v130
  %144 = vmatprep.subr.bf16.mxu0 0
  %145 = vmatpush1.bf16.msra.mxu0 %v129
  %146 = vmatprep.subr.bf16.mxu0 0
  %147 = vmatpush1.bf16.msra.mxu0 %v128
  %148 = vmatprep.subr.bf16.mxu0 0
  %149 = vmatpush1.bf16.msra.mxu0 %v127
  %150 = vmatprep.subr.bf16.mxu0 0
  %151 = vmatpush1.bf16.msra.mxu0 %v126
  %152 = vmatprep.subr.bf16.mxu0 0
  %153 = vmatpush1.bf16.msra.mxu0 %v125
  %154 = vmatprep.subr.bf16.mxu0 0
  %155 = vmatpush1.bf16.msra.mxu0 %v124
  %156 = vmatprep.subr.bf16.mxu0 0
  %157 = vmatpush2.bf16.msra.mxu0 0
  %158 = vmatprep.subr.bf16.mxu0 0
  %159 = vmatpush2.bf16.msra.mxu0 0
  %160 = vmatprep.subr.bf16.mxu0 0
  %161 = vmatpush2.bf16.msra.mxu0 0
  %162 = vmatprep.subr.bf16.mxu0 0
  %163 = vmatpush2.bf16.msra.mxu0 0
  %164 = vmatprep.subr.bf16.mxu0 0
  %165 = vmatpush2.bf16.msra.mxu0 0
  %166 = vmatprep.subr.bf16.mxu0 0
  %167 = vmatpush2.bf16.msra.mxu0 0
  %168 = vmatprep.subr.bf16.mxu0 0
  %169 = vmatpush2.bf16.msra.mxu0 0
  %170 = vmatprep.subr.bf16.mxu0 0
  %171 = vmatpush2.bf16.msra.mxu0 0
  %172 = vmatprep.mubr.bf16.mxu0 0
  %173 = vmatmul.mubr.bf16.gmra.mxu0 %v76
  %v174 = vpop.f32.mrf.mxu0
  %v175 = vadd.f32 0.0, %v174
  %v176 = vpop.f32.mrf.mxu0
  %v177 = vpop.f32.mrf.mxu0
  %v178 = vadd.f32 0.0, %v177
  %v179 = vpop.f32.mrf.mxu0
  %180 = vmatprep.mubr.bf16.mxu0 0
  %181 = vmatmul.mubr.bf16.gmra.mxu0 %v77
  %v182 = vpop.f32.mrf.mxu0
  %v183 = vadd.f32 0.0, %v182
  %v184 = vpop.f32.mrf.mxu0
  %v185 = vpop.f32.mrf.mxu0
  %v186 = vadd.f32 0.0, %v185
  %v187 = vpop.f32.mrf.mxu0
  %188 = vmatprep.mubr.bf16.mxu0 0
  %189 = vmatmul.mubr.bf16.gmra.mxu0 %v78
  %v190 = vpop.f32.mrf.mxu0
  %v191 = vadd.f32 0.0, %v190
  %v192 = vpop.f32.mrf.mxu0
  %v193 = vpop.f32.mrf.mxu0
  %v194 = vadd.f32 0.0, %v193
  %v195 = vpop.f32.mrf.mxu0
  %196 = vmatprep.mubr.bf16.mxu0 0
  %197 = vmatmul.mubr.bf16.gmra.mxu0 %v79
  %v198 = vpop.f32.mrf.mxu0
  %v199 = vadd.f32 0.0, %v198
  %v200 = vpop.f32.mrf.mxu0
  %v201 = vpop.f32.mrf.mxu0
  %v202 = vadd.f32 0.0, %v201
  %v203 = vpop.f32.mrf.mxu0
  %204 = vmatprep.mubr.bf16.mxu0 0
  %205 = vmatmul.mubr.bf16.gmra.mxu0 %v80
  %v206 = vpop.f32.mrf.mxu0
  %v207 = vadd.f32 0.0, %v206
  %v208 = vpop.f32.mrf.mxu0
  %v209 = vpop.f32.mrf.mxu0
  %v210 = vadd.f32 0.0, %v209
  %v211 = vpop.f32.mrf.mxu0
  %212 = vmatprep.mubr.bf16.mxu0 0
  %213 = vmatmul.mubr.bf16.gmra.mxu0 %v81
  %v214 = vpop.f32.mrf.mxu0
  %v215 = vadd.f32 0.0, %v214
  %v216 = vpop.f32.mrf.mxu0
  %v217 = vpop.f32.mrf.mxu0
  %v218 = vadd.f32 0.0, %v217
  %v219 = vpop.f32.mrf.mxu0
  %220 = vmatprep.mubr.bf16.mxu0 0
  %221 = vmatmul.mubr.bf16.gmra.mxu0 %v82
  %v222 = vpop.f32.mrf.mxu0
  %v223 = vadd.f32 0.0, %v222
  %v224 = vpop.f32.mrf.mxu0
  %v225 = vpop.f32.mrf.mxu0
  %v226 = vadd.f32 0.0, %v225
  %v227 = vpop.f32.mrf.mxu0
  %228 = vmatprep.mubr.bf16.mxu0 0
  %229 = vmatmul.mubr.bf16.gmra.mxu0 %v83
  %v230 = vpop.f32.mrf.mxu0
  %v231 = vadd.f32 0.0, %v230
  %v232 = vpop.f32.mrf.mxu0
  %v233 = vpop.f32.mrf.mxu0
  %v234 = vadd.f32 0.0, %v233
  %v235 = vpop.f32.mrf.mxu0
  %236 = vdwg.mxu0
  %v237 = vpack.c.bf16 %v178, %v175
  %v238 = vpack.c.bf16 %v186, %v183
  %v239 = vpack.c.bf16 %v194, %v191
  %v240 = vpack.c.bf16 %v202, %v199
  %v241 = vpack.c.bf16 %v210, %v207
  %v242 = vpack.c.bf16 %v218, %v215
  %v243 = vpack.c.bf16 %v226, %v223
  %v244 = vpack.c.bf16 %v234, %v231
  %v253 = vunpack.c.l.b16 %v237
  %v254 = vunpack.c.h.b16 %v237
  %v255 = vunpack.c.l.b16 %v238
  %v256 = vunpack.c.h.b16 %v238
  %v257 = vunpack.c.l.b16 %v239
  %v258 = vunpack.c.h.b16 %v239
  %v259 = vunpack.c.l.b16 %v240
  %v260 = vunpack.c.h.b16 %v240
  %v261 = vunpack.c.l.b16 %v241
  %v262 = vunpack.c.h.b16 %v241
  %v263 = vunpack.c.l.b16 %v242
  %v264 = vunpack.c.h.b16 %v242
  %v265 = vunpack.c.l.b16 %v243
  %v266 = vunpack.c.h.b16 %v243
  %v267 = vunpack.c.l.b16 %v244
  %v268 = vunpack.c.h.b16 %v244
  %v269 = vpack.c.b16 %v253, %v253
  %v270 = vpack.c.b16 %v254, %v254
  %v271 = vpack.c.b16 %v255, %v255
  %v272 = vpack.c.b16 %v256, %v256
  %v273 = vpack.c.b16 %v257, %v257
  %v274 = vpack.c.b16 %v258, %v258
  %v275 = vpack.c.b16 %v259, %v259
  %v276 = vpack.c.b16 %v260, %v260
  %v277 = vpack.c.b16 %v261, %v261
  %v278 = vpack.c.b16 %v262, %v262
  %v279 = vpack.c.b16 %v263, %v263
  %v280 = vpack.c.b16 %v264, %v264
  %v281 = vpack.c.b16 %v265, %v265
  %v282 = vpack.c.b16 %v266, %v266
  %v283 = vpack.c.b16 %v267, %v267
  %v284 = vpack.c.b16 %v268, %v268
  %301 = vst [vmem:[%s2] sm:$0xf] %v269
  %302 = vst [vmem:[%s2 + $0x4] sm:$0xf] %v270
  %303 = vst [vmem:[%s2 + $0x8] sm:$0xf] %v271
  %304 = vst [vmem:[%s2 + $0xc] sm:$0xf] %v272
  %305 = vst [vmem:[%s2 + $0x10] sm:$0xf] %v273
  %306 = vst [vmem:[%s2 + $0x14] sm:$0xf] %v274
  %307 = vst [vmem:[%s2 + $0x18] sm:$0xf] %v275
  %308 = vst [vmem:[%s2 + $0x1c] sm:$0xf] %v276
  %309 = vst [vmem:[%s2 + $0x20] sm:$0xf] %v277
  %310 = vst [vmem:[%s2 + $0x24] sm:$0xf] %v278
  %311 = vst [vmem:[%s2 + $0x28] sm:$0xf] %v279
  %312 = vst [vmem:[%s2 + $0x2c] sm:$0xf] %v280
  %313 = vst [vmem:[%s2 + $0x30] sm:$0xf] %v281
  %314 = vst [vmem:[%s2 + $0x34] sm:$0xf] %v282
  %315 = vst [vmem:[%s2 + $0x38] sm:$0xf] %v283
  %316 = vst [vmem:[%s2 + $0x3c] sm:$0xf] %v284
  // Predicated region
  $region10: #{dysat_gcn_forward.3} parent=0 // pred_check
    _
  $region11: #{dysat_gcn_forward.3} parent=0 // pred_check_branch
    %318 = sbr.rel (0) target = $region13
  $region12: #{dysat_gcn_forward.3} parent=0 // pred_region
    _
  $region13: #{dysat_gcn_forward.3} parent=0 // pred_fallthru
    _
  // Predicated region
  $region14: #{dysat_gcn_forward.3} parent=0 // pred_check
    _
  $region15: #{dysat_gcn_forward.3} parent=0 // pred_check_branch
    %320 = sbr.rel (0) target = $region17
  $region16: #{dysat_gcn_forward.3} parent=0 // pred_region
    _
  $region17: #{dysat_gcn_forward.3} parent=0 // pred_fallthru
    _

// kernel: dysat_gcn_forward.5
$region0: #{dysat_gcn_forward.5}
  #allocation0 [shape = 'u32[]', space=smem, size = 0x4, offset = 0x4, fixed_abs, tag = 'smem constant byte address 0x4 - core index']
  #allocation1 [shape = 'u32[144,128]{1,0:T(1,128)}', space=vmem, size = 0x12000, scoped, tag = 'internal scratch']
  #allocation2 [shape = 'f32[128,128]{1,0:T(8,128)}', space=vmem, size = 0x10000, scoped, tag = 'scratch operand']
  %s0 = inlined_call_operand.vmem [shape: bf16[128,128], index: 0, kind: input, shape index: {}]
  %s1 = inlined_call_operand.vmem [shape: bf16[128,128], index: 1, kind: input, shape index: {}]
  %s2 = inlined_call_operand.vmem [shape: f32[1,128], index: 2, kind: input, shape index: {}]
  %s3 = inlined_call_operand.vmem [shape: f32[128,128], index: 3, kind: output, shape index: {}]
  %s4 = sld [smem:[#allocation0]]
  $region30: #{dysat_gcn_forward.5} parent=0
    _
  %s6 = ssub.s32 1, %s4
  %s7 = scalar_select 0, %s6, %s4
  // Predicated region
  $region2: #{dysat_gcn_forward.5} parent=0 // pred_check
    _
  $region3: #{dysat_gcn_forward.5} parent=0 // pred_check_branch
    %9 = sbr.rel (0) target = $region5
  $region4: #{dysat_gcn_forward.5} parent=0 // pred_region
    _
  $region5: #{dysat_gcn_forward.5} parent=0 // pred_fallthru
    _
  // Predicated region
  $region6: #{dysat_gcn_forward.5} parent=0 // pred_check
    _
  $region7: #{dysat_gcn_forward.5} parent=0 // pred_check_branch
    %11 = sbr.rel (0) target = $region9
  $region8: #{dysat_gcn_forward.5} parent=0 // pred_region
    _
  $region9: #{dysat_gcn_forward.5} parent=0 // pred_fallthru
    _
  // Predicated region
  $region10: #{dysat_gcn_forward.5} parent=0 // pred_check
    _
  $region11: #{dysat_gcn_forward.5} parent=0 // pred_check_branch
    %13 = sbr.rel (0) target = $region13
  $region12: #{dysat_gcn_forward.5} parent=0 // pred_region
    _
  $region13: #{dysat_gcn_forward.5} parent=0 // pred_fallthru
    _
  %p15 = scmp.eq.s32.totalorder 0, 0
  // Predicated region
  $region14: #{dysat_gcn_forward.5} parent=0 // pred_check
    %p16 = pneg %p15
  $region15: #{dysat_gcn_forward.5} parent=0 // pred_check_branch
    %18 = sbr.rel (%p16) target = $region17
  $region16: #{dysat_gcn_forward.5} parent=0 // pred_region
    %19 = vst [vmem:[#allocation2] sm:$0xff] 0.0
    %20 = vst [vmem:[#allocation2 + $0x8] sm:$0xff] 0.0
    %21 = vst [vmem:[#allocation2 + $0x10] sm:$0xff] 0.0
    %22 = vst [vmem:[#allocation2 + $0x18] sm:$0xff] 0.0
    %23 = vst [vmem:[#allocation2 + $0x20] sm:$0xff] 0.0
    %24 = vst [vmem:[#allocation2 + $0x28] sm:$0xff] 0.0
    %25 = vst [vmem:[#allocation2 + $0x30] sm:$0xff] 0.0
    %26 = vst [vmem:[#allocation2 + $0x38] sm:$0xff] 0.0
    %27 = vst [vmem:[#allocation2 + $0x40] sm:$0xff] 0.0
    %28 = vst [vmem:[#allocation2 + $0x48] sm:$0xff] 0.0
    %29 = vst [vmem:[#allocation2 + $0x50] sm:$0xff] 0.0
    %30 = vst [vmem:[#allocation2 + $0x58] sm:$0xff] 0.0
    %31 = vst [vmem:[#allocation2 + $0x60] sm:$0xff] 0.0
    %32 = vst [vmem:[#allocation2 + $0x68] sm:$0xff] 0.0
    %33 = vst [vmem:[#allocation2 + $0x70] sm:$0xff] 0.0
    %34 = vst [vmem:[#allocation2 + $0x78] sm:$0xff] 0.0
  $region17: #{dysat_gcn_forward.5} parent=0 // pred_fallthru
    _
  %s35 = smul.u32 0, 128
  %s36 = sshra.s32 %s35, 3
  %s37 = sand.u32 %s35, 7
  %s38 = smul.addr %s36, 4
  %s39 = scalar_lea.vmem %s1, %s38
  %v40 = vld [vmem:[%s39] sm:$0xf]
  %v41 = vld [vmem:[%s39 + $0x4] sm:$0xf]
  %v42 = vld [vmem:[%s39 + $0x8] sm:$0xf]
  %v43 = vld [vmem:[%s39 + $0xc] sm:$0xf]
  %v44 = vld [vmem:[%s39 + $0x10] sm:$0xf]
  %v45 = vld [vmem:[%s39 + $0x14] sm:$0xf]
  %v46 = vld [vmem:[%s39 + $0x18] sm:$0xf]
  %v47 = vld [vmem:[%s39 + $0x1c] sm:$0xf]
  %v48 = vld [vmem:[%s39 + $0x20] sm:$0xf]
  %v49 = vld [vmem:[%s39 + $0x24] sm:$0xf]
  %v50 = vld [vmem:[%s39 + $0x28] sm:$0xf]
  %v51 = vld [vmem:[%s39 + $0x2c] sm:$0xf]
  %v52 = vld [vmem:[%s39 + $0x30] sm:$0xf]
  %v53 = vld [vmem:[%s39 + $0x34] sm:$0xf]
  %v54 = vld [vmem:[%s39 + $0x38] sm:$0xf]
  %v55 = vld [vmem:[%s39 + $0x3c] sm:$0xf]
  %v56 = vld [vmem:[#allocation2] sm:$0xff]
  %v57 = vld [vmem:[#allocation2 + $0x8] sm:$0xff]
  %v58 = vld [vmem:[#allocation2 + $0x10] sm:$0xff]
  %v59 = vld [vmem:[#allocation2 + $0x18] sm:$0xff]
  %v60 = vld [vmem:[#allocation2 + $0x20] sm:$0xff]
  %v61 = vld [vmem:[#allocation2 + $0x28] sm:$0xff]
  %v62 = vld [vmem:[#allocation2 + $0x30] sm:$0xff]
  %v63 = vld [vmem:[#allocation2 + $0x38] sm:$0xff]
  %v64 = vld [vmem:[#allocation2 + $0x40] sm:$0xff]
  %v65 = vld [vmem:[#allocation2 + $0x48] sm:$0xff]
  %v66 = vld [vmem:[#allocation2 + $0x50] sm:$0xff]
  %v67 = vld [vmem:[#allocation2 + $0x58] sm:$0xff]
  %v68 = vld [vmem:[#allocation2 + $0x60] sm:$0xff]
  %v69 = vld [vmem:[#allocation2 + $0x68] sm:$0xff]
  %v70 = vld [vmem:[#allocation2 + $0x70] sm:$0xff]
  %v71 = vld [vmem:[#allocation2 + $0x78] sm:$0xff]
  %v72 = vld [vmem:[%s0] sm:$0xf]
  %v73 = vld [vmem:[%s0 + $0x4] sm:$0xf]
  %v74 = vld [vmem:[%s0 + $0x8] sm:$0xf]
  %v75 = vld [vmem:[%s0 + $0xc] sm:$0xf]
  %v76 = vld [vmem:[%s0 + $0x10] sm:$0xf]
  %v77 = vld [vmem:[%s0 + $0x14] sm:$0xf]
  %v78 = vld [vmem:[%s0 + $0x18] sm:$0xf]
  %v79 = vld [vmem:[%s0 + $0x1c] sm:$0xf]
  %v80 = vld [vmem:[%s0 + $0x20] sm:$0xf]
  %v81 = vld [vmem:[%s0 + $0x24] sm:$0xf]
  %v82 = vld [vmem:[%s0 + $0x28] sm:$0xf]
  %v83 = vld [vmem:[%s0 + $0x2c] sm:$0xf]
  %v84 = vld [vmem:[%s0 + $0x30] sm:$0xf]
  %v85 = vld [vmem:[%s0 + $0x34] sm:$0xf]
  %v86 = vld [vmem:[%s0 + $0x38] sm:$0xf]
  %v87 = vld [vmem:[%s0 + $0x3c] sm:$0xf]
  %v104 = vunpack.c.l.b16 %v72
  %v105 = vunpack.c.l.b16 %v73
  %v106 = vunpack.c.l.b16 %v74
  %v107 = vunpack.c.l.b16 %v75
  %v108 = vunpack.c.l.b16 %v76
  %v109 = vunpack.c.l.b16 %v77
  %v110 = vunpack.c.l.b16 %v78
  %v111 = vunpack.c.l.b16 %v79
  %v112 = vunpack.c.l.b16 %v80
  %v113 = vunpack.c.l.b16 %v81
  %v114 = vunpack.c.l.b16 %v82
  %v115 = vunpack.c.l.b16 %v83
  %v116 = vunpack.c.l.b16 %v84
  %v117 = vunpack.c.l.b16 %v85
  %v118 = vunpack.c.l.b16 %v86
  %v119 = vunpack.c.l.b16 %v87
  %v120 = vpack.c.b16 %v105, %v104
  %v121 = vpack.c.b16 %v107, %v106
  %v122 = vpack.c.b16 %v109, %v108
  %v123 = vpack.c.b16 %v111, %v110
  %v124 = vpack.c.b16 %v113, %v112
  %v125 = vpack.c.b16 %v115, %v114
  %v126 = vpack.c.b16 %v117, %v116
  %v127 = vpack.c.b16 %v119, %v118
  %v152 = vunpack.c.l.b16 %v40
  %v153 = vunpack.c.l.b16 %v41
  %v154 = vunpack.c.l.b16 %v42
  %v155 = vunpack.c.l.b16 %v43
  %v156 = vunpack.c.l.b16 %v44
  %v157 = vunpack.c.l.b16 %v45
  %v158 = vunpack.c.l.b16 %v46
  %v159 = vunpack.c.l.b16 %v47
  %v160 = vunpack.c.l.b16 %v48
  %v161 = vunpack.c.l.b16 %v49
  %v162 = vunpack.c.l.b16 %v50
  %v163 = vunpack.c.l.b16 %v51
  %v164 = vunpack.c.l.b16 %v52
  %v165 = vunpack.c.l.b16 %v53
  %v166 = vunpack.c.l.b16 %v54
  %v167 = vunpack.c.l.b16 %v55
  %v168 = vpack.c.b16 %v153, %v152
  %v169 = vpack.c.b16 %v155, %v154
  %v170 = vpack.c.b16 %v157, %v156
  %v171 = vpack.c.b16 %v159, %v158
  %v172 = vpack.c.b16 %v161, %v160
  %v173 = vpack.c.b16 %v163, %v162
  %v174 = vpack.c.b16 %v165, %v164
  %v175 = vpack.c.b16 %v167, %v166
  %184 = vmatprep.subr.bf16.mxu0 0
  %185 = vmatpush1.bf16.msra.mxu0 %v175
  %186 = vmatprep.subr.bf16.mxu0 0
  %187 = vmatpush1.bf16.msra.mxu0 %v174
  %188 = vmatprep.subr.bf16.mxu0 0
  %189 = vmatpush1.bf16.msra.mxu0 %v173
  %190 = vmatprep.subr.bf16.mxu0 0
  %191 = vmatpush1.bf16.msra.mxu0 %v172
  %192 = vmatprep.subr.bf16.mxu0 0
  %193 = vmatpush1.bf16.msra.mxu0 %v171
  %194 = vmatprep.subr.bf16.mxu0 0
  %195 = vmatpush1.bf16.msra.mxu0 %v170
  %196 = vmatprep.subr.bf16.mxu0 0
  %197 = vmatpush1.bf16.msra.mxu0 %v169
  %198 = vmatprep.subr.bf16.mxu0 0
  %199 = vmatpush1.bf16.msra.mxu0 %v168
  %200 = vmatprep.subr.bf16.mxu0 0
  %201 = vmatpush2.bf16.msra.mxu0 0
  %202 = vmatprep.subr.bf16.mxu0 0
  %203 = vmatpush2.bf16.msra.mxu0 0
  %204 = vmatprep.subr.bf16.mxu0 0
  %205 = vmatpush2.bf16.msra.mxu0 0
  %206 = vmatprep.subr.bf16.mxu0 0
  %207 = vmatpush2.bf16.msra.mxu0 0
  %208 = vmatprep.subr.bf16.mxu0 0
  %209 = vmatpush2.bf16.msra.mxu0 0
  %210 = vmatprep.subr.bf16.mxu0 0
  %211 = vmatpush2.bf16.msra.mxu0 0
  %212 = vmatprep.subr.bf16.mxu0 0
  %213 = vmatpush2.bf16.msra.mxu0 0
  %214 = vmatprep.subr.bf16.mxu0 0
  %215 = vmatpush2.bf16.msra.mxu0 0
  %216 = vmatprep.mubr.bf16.mxu0 0
  %217 = vmatmul.mubr.bf16.gmra.mxu0 %v120
  %v218 = vpop.f32.mrf.mxu0
  %v219 = vadd.f32 0.0, %v218
  %v220 = vpop.f32.mrf.mxu0
  %v221 = vpop.f32.mrf.mxu0
  %v222 = vadd.f32 0.0, %v221
  %v223 = vpop.f32.mrf.mxu0
  %224 = vmatprep.mubr.bf16.mxu0 0
  %225 = vmatmul.mubr.bf16.gmra.mxu0 %v121
  %v226 = vpop.f32.mrf.mxu0
  %v227 = vadd.f32 0.0, %v226
  %v228 = vpop.f32.mrf.mxu0
  %v229 = vpop.f32.mrf.mxu0
  %v230 = vadd.f32 0.0, %v229
  %v231 = vpop.f32.mrf.mxu0
  %232 = vmatprep.mubr.bf16.mxu0 0
  %233 = vmatmul.mubr.bf16.gmra.mxu0 %v122
  %v234 = vpop.f32.mrf.mxu0
  %v235 = vadd.f32 0.0, %v234
  %v236 = vpop.f32.mrf.mxu0
  %v237 = vpop.f32.mrf.mxu0
  %v238 = vadd.f32 0.0, %v237
  %v239 = vpop.f32.mrf.mxu0
  %240 = vmatprep.mubr.bf16.mxu0 0
  %241 = vmatmul.mubr.bf16.gmra.mxu0 %v123
  %v242 = vpop.f32.mrf.mxu0
  %v243 = vadd.f32 0.0, %v242
  %v244 = vpop.f32.mrf.mxu0
  %v245 = vpop.f32.mrf.mxu0
  %v246 = vadd.f32 0.0, %v245
  %v247 = vpop.f32.mrf.mxu0
  %248 = vmatprep.mubr.bf16.mxu0 0
  %249 = vmatmul.mubr.bf16.gmra.mxu0 %v124
  %v250 = vpop.f32.mrf.mxu0
  %v251 = vadd.f32 0.0, %v250
  %v252 = vpop.f32.mrf.mxu0
  %v253 = vpop.f32.mrf.mxu0
  %v254 = vadd.f32 0.0, %v253
  %v255 = vpop.f32.mrf.mxu0
  %256 = vmatprep.mubr.bf16.mxu0 0
  %257 = vmatmul.mubr.bf16.gmra.mxu0 %v125
  %v258 = vpop.f32.mrf.mxu0
  %v259 = vadd.f32 0.0, %v258
  %v260 = vpop.f32.mrf.mxu0
  %v261 = vpop.f32.mrf.mxu0
  %v262 = vadd.f32 0.0, %v261
  %v263 = vpop.f32.mrf.mxu0
  %264 = vmatprep.mubr.bf16.mxu0 0
  %265 = vmatmul.mubr.bf16.gmra.mxu0 %v126
  %v266 = vpop.f32.mrf.mxu0
  %v267 = vadd.f32 0.0, %v266
  %v268 = vpop.f32.mrf.mxu0
  %v269 = vpop.f32.mrf.mxu0
  %v270 = vadd.f32 0.0, %v269
  %v271 = vpop.f32.mrf.mxu0
  %272 = vmatprep.mubr.bf16.mxu0 0
  %273 = vmatmul.mubr.bf16.gmra.mxu0 %v127
  %v274 = vpop.f32.mrf.mxu0
  %v275 = vadd.f32 0.0, %v274
  %v276 = vpop.f32.mrf.mxu0
  %v277 = vpop.f32.mrf.mxu0
  %v278 = vadd.f32 0.0, %v277
  %v279 = vpop.f32.mrf.mxu0
  %280 = vdwg.mxu0
  %v281 = vadd.f32 %v56, %v219
  %v282 = vadd.f32 %v57, %v222
  %v283 = vadd.f32 %v58, %v227
  %v284 = vadd.f32 %v59, %v230
  %v285 = vadd.f32 %v60, %v235
  %v286 = vadd.f32 %v61, %v238
  %v287 = vadd.f32 %v62, %v243
  %v288 = vadd.f32 %v63, %v246
  %v289 = vadd.f32 %v64, %v251
  %v290 = vadd.f32 %v65, %v254
  %v291 = vadd.f32 %v66, %v259
  %v292 = vadd.f32 %v67, %v262
  %v293 = vadd.f32 %v68, %v267
  %v294 = vadd.f32 %v69, %v270
  %v295 = vadd.f32 %v70, %v275
  %v296 = vadd.f32 %v71, %v278
  %297 = vst [vmem:[#allocation2] sm:$0xff] %v281
  %298 = vst [vmem:[#allocation2 + $0x8] sm:$0xff] %v282
  %299 = vst [vmem:[#allocation2 + $0x10] sm:$0xff] %v283
  %300 = vst [vmem:[#allocation2 + $0x18] sm:$0xff] %v284
  %301 = vst [vmem:[#allocation2 + $0x20] sm:$0xff] %v285
  %302 = vst [vmem:[#allocation2 + $0x28] sm:$0xff] %v286
  %303 = vst [vmem:[#allocation2 + $0x30] sm:$0xff] %v287
  %304 = vst [vmem:[#allocation2 + $0x38] sm:$0xff] %v288
  %305 = vst [vmem:[#allocation2 + $0x40] sm:$0xff] %v289
  %306 = vst [vmem:[#allocation2 + $0x48] sm:$0xff] %v290
  %307 = vst [vmem:[#allocation2 + $0x50] sm:$0xff] %v291
  %308 = vst [vmem:[#allocation2 + $0x58] sm:$0xff] %v292
  %309 = vst [vmem:[#allocation2 + $0x60] sm:$0xff] %v293
  %310 = vst [vmem:[#allocation2 + $0x68] sm:$0xff] %v294
  %311 = vst [vmem:[#allocation2 + $0x70] sm:$0xff] %v295
  %312 = vst [vmem:[#allocation2 + $0x78] sm:$0xff] %v296
  // Predicated region
  $region18: #{dysat_gcn_forward.5} parent=0 // pred_check
    %p313 = pneg %p15
  $region19: #{dysat_gcn_forward.5} parent=0 // pred_check_branch
    %315 = sbr.rel (%p313) target = $region21
  $region20: #{dysat_gcn_forward.5} parent=0 // pred_region
    %v316 = vld [vmem:[#allocation2] sm:$0xff]
    %v317 = vld [vmem:[#allocation2 + $0x8] sm:$0xff]
    %v318 = vld [vmem:[#allocation2 + $0x10] sm:$0xff]
    %v319 = vld [vmem:[#allocation2 + $0x18] sm:$0xff]
    %v320 = vld [vmem:[#allocation2 + $0x20] sm:$0xff]
    %v321 = vld [vmem:[#allocation2 + $0x28] sm:$0xff]
    %v322 = vld [vmem:[#allocation2 + $0x30] sm:$0xff]
    %v323 = vld [vmem:[#allocation2 + $0x38] sm:$0xff]
    %v324 = vld [vmem:[#allocation2 + $0x40] sm:$0xff]
    %v325 = vld [vmem:[#allocation2 + $0x48] sm:$0xff]
    %v326 = vld [vmem:[#allocation2 + $0x50] sm:$0xff]
    %v327 = vld [vmem:[#allocation2 + $0x58] sm:$0xff]
    %v328 = vld [vmem:[#allocation2 + $0x60] sm:$0xff]
    %v329 = vld [vmem:[#allocation2 + $0x68] sm:$0xff]
    %v330 = vld [vmem:[#allocation2 + $0x70] sm:$0xff]
    %v331 = vld [vmem:[#allocation2 + $0x78] sm:$0xff]
    %v332 = vld [vmem:[%s2] sm:$0x1]
    %v334 = vlaneseq
    %v335 = vshrl.u32 %v334, 7
    %v336 = vsub.s32 0, %v335
    %v337 = vrot.slane %v332, %v336
    %v339 = vadd.f32 %v316, %v337
    %v340 = vadd.f32 %v317, %v337
    %v341 = vadd.f32 %v318, %v337
    %v342 = vadd.f32 %v319, %v337
    %v343 = vadd.f32 %v320, %v337
    %v344 = vadd.f32 %v321, %v337
    %v345 = vadd.f32 %v322, %v337
    %v346 = vadd.f32 %v323, %v337
    %v347 = vadd.f32 %v324, %v337
    %v348 = vadd.f32 %v325, %v337
    %v349 = vadd.f32 %v326, %v337
    %v350 = vadd.f32 %v327, %v337
    %v351 = vadd.f32 %v328, %v337
    %v352 = vadd.f32 %v329, %v337
    %v353 = vadd.f32 %v330, %v337
    %v354 = vadd.f32 %v331, %v337
    %355 = vst [vmem:[%s3] sm:$0xff] %v339
    %356 = vst [vmem:[%s3 + $0x8] sm:$0xff] %v340
    %357 = vst [vmem:[%s3 + $0x10] sm:$0xff] %v341
    %358 = vst [vmem:[%s3 + $0x18] sm:$0xff] %v342
    %359 = vst [vmem:[%s3 + $0x20] sm:$0xff] %v343
    %360 = vst [vmem:[%s3 + $0x28] sm:$0xff] %v344
    %361 = vst [vmem:[%s3 + $0x30] sm:$0xff] %v345
    %362 = vst [vmem:[%s3 + $0x38] sm:$0xff] %v346
    %363 = vst [vmem:[%s3 + $0x40] sm:$0xff] %v347
    %364 = vst [vmem:[%s3 + $0x48] sm:$0xff] %v348
    %365 = vst [vmem:[%s3 + $0x50] sm:$0xff] %v349
    %366 = vst [vmem:[%s3 + $0x58] sm:$0xff] %v350
    %367 = vst [vmem:[%s3 + $0x60] sm:$0xff] %v351
    %368 = vst [vmem:[%s3 + $0x68] sm:$0xff] %v352
    %369 = vst [vmem:[%s3 + $0x70] sm:$0xff] %v353
    %370 = vst [vmem:[%s3 + $0x78] sm:$0xff] %v354
  $region21: #{dysat_gcn_forward.5} parent=0 // pred_fallthru
    _
  // Predicated region
  $region22: #{dysat_gcn_forward.5} parent=0 // pred_check
    _
  $region23: #{dysat_gcn_forward.5} parent=0 // pred_check_branch
    %372 = sbr.rel (0) target = $region25
  $region24: #{dysat_gcn_forward.5} parent=0 // pred_region
    _
  $region25: #{dysat_gcn_forward.5} parent=0 // pred_fallthru
    _
  // Predicated region
  $region26: #{dysat_gcn_forward.5} parent=0 // pred_check
    _
  $region27: #{dysat_gcn_forward.5} parent=0 // pred_check_branch
    %374 = sbr.rel (0) target = $region29
  $region28: #{dysat_gcn_forward.5} parent=0 // pred_region
    _
  $region29: #{dysat_gcn_forward.5} parent=0 // pred_fallthru
    _

// kernel: dysat_gcn_forward.4
$region0: #{dysat_gcn_forward.4}
  #allocation0 [shape = 'u32[]', space=smem, size = 0x4, offset = 0x4, fixed_abs, tag = 'smem constant byte address 0x4 - core index']
  #allocation1 [shape = 'u32[144,128]{1,0:T(1,128)}', space=vmem, size = 0x12000, scoped, tag = 'internal scratch']
  #allocation2 [shape = 'f32[128,128]{1,0:T(8,128)}', space=vmem, size = 0x10000, scoped, tag = 'scratch operand']
  %s0 = inlined_call_operand.vmem [shape: bf16[128,128], index: 0, kind: input, shape index: {}]
  %s1 = inlined_call_operand.vmem [shape: bf16[128,128], index: 1, kind: input, shape index: {}]
  %s2 = inlined_call_operand.vmem [shape: f32[1,128], index: 2, kind: input, shape index: {}]
  %s3 = inlined_call_operand.vmem [shape: bf16[128,128], index: 3, kind: input, shape index: {}]
  %s4 = inlined_call_operand.vmem [shape: f32[1,128], index: 4, kind: input, shape index: {}]
  %s5 = inlined_call_operand.vmem [shape: f32[1,128], index: 5, kind: input, shape index: {}]
  %s6 = inlined_call_operand.vmem [shape: f32[1,128], index: 6, kind: input, shape index: {}]
  %s7 = inlined_call_operand.vmem [shape: bf16[128,128], index: 7, kind: input, shape index: {}]
  %s8 = inlined_call_operand.vmem [shape: bf16[128,128], index: 8, kind: output, shape index: {}]
  %s9 = sld [smem:[#allocation0]]
  $region50: #{dysat_gcn_forward.4} parent=0
    _
  %s11 = ssub.s32 1, %s9
  %s12 = scalar_select 0, %s11, %s9
  // Predicated region
  $region2: #{dysat_gcn_forward.4} parent=0 // pred_check
    _
  $region3: #{dysat_gcn_forward.4} parent=0 // pred_check_branch
    %14 = sbr.rel (0) target = $region5
  $region4: #{dysat_gcn_forward.4} parent=0 // pred_region
    _
  $region5: #{dysat_gcn_forward.4} parent=0 // pred_fallthru
    _
  // Predicated region
  $region6: #{dysat_gcn_forward.4} parent=0 // pred_check
    _
  $region7: #{dysat_gcn_forward.4} parent=0 // pred_check_branch
    %16 = sbr.rel (0) target = $region9
  $region8: #{dysat_gcn_forward.4} parent=0 // pred_region
    _
  $region9: #{dysat_gcn_forward.4} parent=0 // pred_fallthru
    _
  // Predicated region
  $region10: #{dysat_gcn_forward.4} parent=0 // pred_check
    _
  $region11: #{dysat_gcn_forward.4} parent=0 // pred_check_branch
    %18 = sbr.rel (0) target = $region13
  $region12: #{dysat_gcn_forward.4} parent=0 // pred_region
    _
  $region13: #{dysat_gcn_forward.4} parent=0 // pred_fallthru
    _
  // Predicated region
  $region14: #{dysat_gcn_forward.4} parent=0 // pred_check
    _
  $region15: #{dysat_gcn_forward.4} parent=0 // pred_check_branch
    %20 = sbr.rel (0) target = $region17
  $region16: #{dysat_gcn_forward.4} parent=0 // pred_region
    _
  $region17: #{dysat_gcn_forward.4} parent=0 // pred_fallthru
    _
  // Predicated region
  $region18: #{dysat_gcn_forward.4} parent=0 // pred_check
    _
  $region19: #{dysat_gcn_forward.4} parent=0 // pred_check_branch
    %22 = sbr.rel (0) target = $region21
  $region20: #{dysat_gcn_forward.4} parent=0 // pred_region
    _
  $region21: #{dysat_gcn_forward.4} parent=0 // pred_fallthru
    _
  // Predicated region
  $region22: #{dysat_gcn_forward.4} parent=0 // pred_check
    _
  $region23: #{dysat_gcn_forward.4} parent=0 // pred_check_branch
    %24 = sbr.rel (0) target = $region25
  $region24: #{dysat_gcn_forward.4} parent=0 // pred_region
    _
  $region25: #{dysat_gcn_forward.4} parent=0 // pred_fallthru
    _
  // Predicated region
  $region26: #{dysat_gcn_forward.4} parent=0 // pred_check
    _
  $region27: #{dysat_gcn_forward.4} parent=0 // pred_check_branch
    %26 = sbr.rel (0) target = $region29
  $region28: #{dysat_gcn_forward.4} parent=0 // pred_region
    _
  $region29: #{dysat_gcn_forward.4} parent=0 // pred_fallthru
    _
  // Predicated region
  $region30: #{dysat_gcn_forward.4} parent=0 // pred_check
    _
  $region31: #{dysat_gcn_forward.4} parent=0 // pred_check_branch
    %28 = sbr.rel (0) target = $region33
  $region32: #{dysat_gcn_forward.4} parent=0 // pred_region
    _
  $region33: #{dysat_gcn_forward.4} parent=0 // pred_fallthru
    _
  %p30 = scmp.eq.s32.totalorder 0, 0
  // Predicated region
  $region34: #{dysat_gcn_forward.4} parent=0 // pred_check
    %p31 = pneg %p30
  $region35: #{dysat_gcn_forward.4} parent=0 // pred_check_branch
    %33 = sbr.rel (%p31) target = $region37
  $region36: #{dysat_gcn_forward.4} parent=0 // pred_region
    %34 = vst [vmem:[#allocation2] sm:$0xff] 0.0
    %35 = vst [vmem:[#allocation2 + $0x8] sm:$0xff] 0.0
    %36 = vst [vmem:[#allocation2 + $0x10] sm:$0xff] 0.0
    %37 = vst [vmem:[#allocation2 + $0x18] sm:$0xff] 0.0
    %38 = vst [vmem:[#allocation2 + $0x20] sm:$0xff] 0.0
    %39 = vst [vmem:[#allocation2 + $0x28] sm:$0xff] 0.0
    %40 = vst [vmem:[#allocation2 + $0x30] sm:$0xff] 0.0
    %41 = vst [vmem:[#allocation2 + $0x38] sm:$0xff] 0.0
    %42 = vst [vmem:[#allocation2 + $0x40] sm:$0xff] 0.0
    %43 = vst [vmem:[#allocation2 + $0x48] sm:$0xff] 0.0
    %44 = vst [vmem:[#allocation2 + $0x50] sm:$0xff] 0.0
    %45 = vst [vmem:[#allocation2 + $0x58] sm:$0xff] 0.0
    %46 = vst [vmem:[#allocation2 + $0x60] sm:$0xff] 0.0
    %47 = vst [vmem:[#allocation2 + $0x68] sm:$0xff] 0.0
    %48 = vst [vmem:[#allocation2 + $0x70] sm:$0xff] 0.0
    %49 = vst [vmem:[#allocation2 + $0x78] sm:$0xff] 0.0
  $region37: #{dysat_gcn_forward.4} parent=0 // pred_fallthru
    _
  %s50 = smul.u32 0, 128
  %s51 = sshra.s32 %s50, 3
  %s52 = sand.u32 %s50, 7
  %s53 = smul.addr %s51, 4
  %s54 = scalar_lea.vmem %s1, %s53
  %v55 = vld [vmem:[%s54] sm:$0xf]
  %v56 = vld [vmem:[%s54 + $0x4] sm:$0xf]
  %v57 = vld [vmem:[%s54 + $0x8] sm:$0xf]
  %v58 = vld [vmem:[%s54 + $0xc] sm:$0xf]
  %v59 = vld [vmem:[%s54 + $0x10] sm:$0xf]
  %v60 = vld [vmem:[%s54 + $0x14] sm:$0xf]
  %v61 = vld [vmem:[%s54 + $0x18] sm:$0xf]
  %v62 = vld [vmem:[%s54 + $0x1c] sm:$0xf]
  %v63 = vld [vmem:[%s54 + $0x20] sm:$0xf]
  %v64 = vld [vmem:[%s54 + $0x24] sm:$0xf]
  %v65 = vld [vmem:[%s54 + $0x28] sm:$0xf]
  %v66 = vld [vmem:[%s54 + $0x2c] sm:$0xf]
  %v67 = vld [vmem:[%s54 + $0x30] sm:$0xf]
  %v68 = vld [vmem:[%s54 + $0x34] sm:$0xf]
  %v69 = vld [vmem:[%s54 + $0x38] sm:$0xf]
  %v70 = vld [vmem:[%s54 + $0x3c] sm:$0xf]
  %v71 = vld [vmem:[#allocation2] sm:$0xff]
  %v72 = vld [vmem:[#allocation2 + $0x8] sm:$0xff]
  %v73 = vld [vmem:[#allocation2 + $0x10] sm:$0xff]
  %v74 = vld [vmem:[#allocation2 + $0x18] sm:$0xff]
  %v75 = vld [vmem:[#allocation2 + $0x20] sm:$0xff]
  %v76 = vld [vmem:[#allocation2 + $0x28] sm:$0xff]
  %v77 = vld [vmem:[#allocation2 + $0x30] sm:$0xff]
  %v78 = vld [vmem:[#allocation2 + $0x38] sm:$0xff]
  %v79 = vld [vmem:[#allocation2 + $0x40] sm:$0xff]
  %v80 = vld [vmem:[#allocation2 + $0x48] sm:$0xff]
  %v81 = vld [vmem:[#allocation2 + $0x50] sm:$0xff]
  %v82 = vld [vmem:[#allocation2 + $0x58] sm:$0xff]
  %v83 = vld [vmem:[#allocation2 + $0x60] sm:$0xff]
  %v84 = vld [vmem:[#allocation2 + $0x68] sm:$0xff]
  %v85 = vld [vmem:[#allocation2 + $0x70] sm:$0xff]
  %v86 = vld [vmem:[#allocation2 + $0x78] sm:$0xff]
  %v87 = vld [vmem:[%s0] sm:$0xf]
  %v88 = vld [vmem:[%s0 + $0x4] sm:$0xf]
  %v89 = vld [vmem:[%s0 + $0x8] sm:$0xf]
  %v90 = vld [vmem:[%s0 + $0xc] sm:$0xf]
  %v91 = vld [vmem:[%s0 + $0x10] sm:$0xf]
  %v92 = vld [vmem:[%s0 + $0x14] sm:$0xf]
  %v93 = vld [vmem:[%s0 + $0x18] sm:$0xf]
  %v94 = vld [vmem:[%s0 + $0x1c] sm:$0xf]
  %v95 = vld [vmem:[%s0 + $0x20] sm:$0xf]
  %v96 = vld [vmem:[%s0 + $0x24] sm:$0xf]
  %v97 = vld [vmem:[%s0 + $0x28] sm:$0xf]
  %v98 = vld [vmem:[%s0 + $0x2c] sm:$0xf]
  %v99 = vld [vmem:[%s0 + $0x30] sm:$0xf]
  %v100 = vld [vmem:[%s0 + $0x34] sm:$0xf]
  %v101 = vld [vmem:[%s0 + $0x38] sm:$0xf]
  %v102 = vld [vmem:[%s0 + $0x3c] sm:$0xf]
  %v119 = vunpack.c.l.b16 %v87
  %v120 = vunpack.c.l.b16 %v88
  %v121 = vunpack.c.l.b16 %v89
  %v122 = vunpack.c.l.b16 %v90
  %v123 = vunpack.c.l.b16 %v91
  %v124 = vunpack.c.l.b16 %v92
  %v125 = vunpack.c.l.b16 %v93
  %v126 = vunpack.c.l.b16 %v94
  %v127 = vunpack.c.l.b16 %v95
  %v128 = vunpack.c.l.b16 %v96
  %v129 = vunpack.c.l.b16 %v97
  %v130 = vunpack.c.l.b16 %v98
  %v131 = vunpack.c.l.b16 %v99
  %v132 = vunpack.c.l.b16 %v100
  %v133 = vunpack.c.l.b16 %v101
  %v134 = vunpack.c.l.b16 %v102
  %v135 = vpack.c.b16 %v120, %v119
  %v136 = vpack.c.b16 %v122, %v121
  %v137 = vpack.c.b16 %v124, %v123
  %v138 = vpack.c.b16 %v126, %v125
  %v139 = vpack.c.b16 %v128, %v127
  %v140 = vpack.c.b16 %v130, %v129
  %v141 = vpack.c.b16 %v132, %v131
  %v142 = vpack.c.b16 %v134, %v133
  %v167 = vunpack.c.l.b16 %v55
  %v168 = vunpack.c.l.b16 %v56
  %v169 = vunpack.c.l.b16 %v57
  %v170 = vunpack.c.l.b16 %v58
  %v171 = vunpack.c.l.b16 %v59
  %v172 = vunpack.c.l.b16 %v60
  %v173 = vunpack.c.l.b16 %v61
  %v174 = vunpack.c.l.b16 %v62
  %v175 = vunpack.c.l.b16 %v63
  %v176 = vunpack.c.l.b16 %v64
  %v177 = vunpack.c.l.b16 %v65
  %v178 = vunpack.c.l.b16 %v66
  %v179 = vunpack.c.l.b16 %v67
  %v180 = vunpack.c.l.b16 %v68
  %v181 = vunpack.c.l.b16 %v69
  %v182 = vunpack.c.l.b16 %v70
  %v183 = vpack.c.b16 %v168, %v167
  %v184 = vpack.c.b16 %v170, %v169
  %v185 = vpack.c.b16 %v172, %v171
  %v186 = vpack.c.b16 %v174, %v173
  %v187 = vpack.c.b16 %v176, %v175
  %v188 = vpack.c.b16 %v178, %v177
  %v189 = vpack.c.b16 %v180, %v179
  %v190 = vpack.c.b16 %v182, %v181
  %199 = vmatprep.subr.bf16.mxu0 0
  %200 = vmatpush1.bf16.msra.mxu0 %v190
  %201 = vmatprep.subr.bf16.mxu0 0
  %202 = vmatpush1.bf16.msra.mxu0 %v189
  %203 = vmatprep.subr.bf16.mxu0 0
  %204 = vmatpush1.bf16.msra.mxu0 %v188
  %205 = vmatprep.subr.bf16.mxu0 0
  %206 = vmatpush1.bf16.msra.mxu0 %v187
  %207 = vmatprep.subr.bf16.mxu0 0
  %208 = vmatpush1.bf16.msra.mxu0 %v186
  %209 = vmatprep.subr.bf16.mxu0 0
  %210 = vmatpush1.bf16.msra.mxu0 %v185
  %211 = vmatprep.subr.bf16.mxu0 0
  %212 = vmatpush1.bf16.msra.mxu0 %v184
  %213 = vmatprep.subr.bf16.mxu0 0
  %214 = vmatpush1.bf16.msra.mxu0 %v183
  %215 = vmatprep.subr.bf16.mxu0 0
  %216 = vmatpush2.bf16.msra.mxu0 0
  %217 = vmatprep.subr.bf16.mxu0 0
  %218 = vmatpush2.bf16.msra.mxu0 0
  %219 = vmatprep.subr.bf16.mxu0 0
  %220 = vmatpush2.bf16.msra.mxu0 0
  %221 = vmatprep.subr.bf16.mxu0 0
  %222 = vmatpush2.bf16.msra.mxu0 0
  %223 = vmatprep.subr.bf16.mxu0 0
  %224 = vmatpush2.bf16.msra.mxu0 0
  %225 = vmatprep.subr.bf16.mxu0 0
  %226 = vmatpush2.bf16.msra.mxu0 0
  %227 = vmatprep.subr.bf16.mxu0 0
  %228 = vmatpush2.bf16.msra.mxu0 0
  %229 = vmatprep.subr.bf16.mxu0 0
  %230 = vmatpush2.bf16.msra.mxu0 0
  %231 = vmatprep.mubr.bf16.mxu0 0
  %232 = vmatmul.mubr.bf16.gmra.mxu0 %v135
  %v233 = vpop.f32.mrf.mxu0
  %v234 = vadd.f32 0.0, %v233
  %v235 = vpop.f32.mrf.mxu0
  %v236 = vpop.f32.mrf.mxu0
  %v237 = vadd.f32 0.0, %v236
  %v238 = vpop.f32.mrf.mxu0
  %239 = vmatprep.mubr.bf16.mxu0 0
  %240 = vmatmul.mubr.bf16.gmra.mxu0 %v136
  %v241 = vpop.f32.mrf.mxu0
  %v242 = vadd.f32 0.0, %v241
  %v243 = vpop.f32.mrf.mxu0
  %v244 = vpop.f32.mrf.mxu0
  %v245 = vadd.f32 0.0, %v244
  %v246 = vpop.f32.mrf.mxu0
  %247 = vmatprep.mubr.bf16.mxu0 0
  %248 = vmatmul.mubr.bf16.gmra.mxu0 %v137
  %v249 = vpop.f32.mrf.mxu0
  %v250 = vadd.f32 0.0, %v249
  %v251 = vpop.f32.mrf.mxu0
  %v252 = vpop.f32.mrf.mxu0
  %v253 = vadd.f32 0.0, %v252
  %v254 = vpop.f32.mrf.mxu0
  %255 = vmatprep.mubr.bf16.mxu0 0
  %256 = vmatmul.mubr.bf16.gmra.mxu0 %v138
  %v257 = vpop.f32.mrf.mxu0
  %v258 = vadd.f32 0.0, %v257
  %v259 = vpop.f32.mrf.mxu0
  %v260 = vpop.f32.mrf.mxu0
  %v261 = vadd.f32 0.0, %v260
  %v262 = vpop.f32.mrf.mxu0
  %263 = vmatprep.mubr.bf16.mxu0 0
  %264 = vmatmul.mubr.bf16.gmra.mxu0 %v139
  %v265 = vpop.f32.mrf.mxu0
  %v266 = vadd.f32 0.0, %v265
  %v267 = vpop.f32.mrf.mxu0
  %v268 = vpop.f32.mrf.mxu0
  %v269 = vadd.f32 0.0, %v268
  %v270 = vpop.f32.mrf.mxu0
  %271 = vmatprep.mubr.bf16.mxu0 0
  %272 = vmatmul.mubr.bf16.gmra.mxu0 %v140
  %v273 = vpop.f32.mrf.mxu0
  %v274 = vadd.f32 0.0, %v273
  %v275 = vpop.f32.mrf.mxu0
  %v276 = vpop.f32.mrf.mxu0
  %v277 = vadd.f32 0.0, %v276
  %v278 = vpop.f32.mrf.mxu0
  %279 = vmatprep.mubr.bf16.mxu0 0
  %280 = vmatmul.mubr.bf16.gmra.mxu0 %v141
  %v281 = vpop.f32.mrf.mxu0
  %v282 = vadd.f32 0.0, %v281
  %v283 = vpop.f32.mrf.mxu0
  %v284 = vpop.f32.mrf.mxu0
  %v285 = vadd.f32 0.0, %v284
  %v286 = vpop.f32.mrf.mxu0
  %287 = vmatprep.mubr.bf16.mxu0 0
  %288 = vmatmul.mubr.bf16.gmra.mxu0 %v142
  %v289 = vpop.f32.mrf.mxu0
  %v290 = vadd.f32 0.0, %v289
  %v291 = vpop.f32.mrf.mxu0
  %v292 = vpop.f32.mrf.mxu0
  %v293 = vadd.f32 0.0, %v292
  %v294 = vpop.f32.mrf.mxu0
  %295 = vdwg.mxu0
  %v296 = vadd.f32 %v71, %v234
  %v297 = vadd.f32 %v72, %v237
  %v298 = vadd.f32 %v73, %v242
  %v299 = vadd.f32 %v74, %v245
  %v300 = vadd.f32 %v75, %v250
  %v301 = vadd.f32 %v76, %v253
  %v302 = vadd.f32 %v77, %v258
  %v303 = vadd.f32 %v78, %v261
  %v304 = vadd.f32 %v79, %v266
  %v305 = vadd.f32 %v80, %v269
  %v306 = vadd.f32 %v81, %v274
  %v307 = vadd.f32 %v82, %v277
  %v308 = vadd.f32 %v83, %v282
  %v309 = vadd.f32 %v84, %v285
  %v310 = vadd.f32 %v85, %v290
  %v311 = vadd.f32 %v86, %v293
  %312 = vst [vmem:[#allocation2] sm:$0xff] %v296
  %313 = vst [vmem:[#allocation2 + $0x8] sm:$0xff] %v297
  %314 = vst [vmem:[#allocation2 + $0x10] sm:$0xff] %v298
  %315 = vst [vmem:[#allocation2 + $0x18] sm:$0xff] %v299
  %316 = vst [vmem:[#allocation2 + $0x20] sm:$0xff] %v300
  %317 = vst [vmem:[#allocation2 + $0x28] sm:$0xff] %v301
  %318 = vst [vmem:[#allocation2 + $0x30] sm:$0xff] %v302
  %319 = vst [vmem:[#allocation2 + $0x38] sm:$0xff] %v303
  %320 = vst [vmem:[#allocation2 + $0x40] sm:$0xff] %v304
  %321 = vst [vmem:[#allocation2 + $0x48] sm:$0xff] %v305
  %322 = vst [vmem:[#allocation2 + $0x50] sm:$0xff] %v306
  %323 = vst [vmem:[#allocation2 + $0x58] sm:$0xff] %v307
  %324 = vst [vmem:[#allocation2 + $0x60] sm:$0xff] %v308
  %325 = vst [vmem:[#allocation2 + $0x68] sm:$0xff] %v309
  %326 = vst [vmem:[#allocation2 + $0x70] sm:$0xff] %v310
  %327 = vst [vmem:[#allocation2 + $0x78] sm:$0xff] %v311
  // Predicated region
  $region38: #{dysat_gcn_forward.4} parent=0 // pred_check
    %p328 = pneg %p30
  $region39: #{dysat_gcn_forward.4} parent=0 // pred_check_branch
    %330 = sbr.rel (%p328) target = $region41
  $region40: #{dysat_gcn_forward.4} parent=0 // pred_region
    %v331 = vld [vmem:[#allocation2] sm:$0xff]
    %v332 = vld [vmem:[#allocation2 + $0x8] sm:$0xff]
    %v333 = vld [vmem:[#allocation2 + $0x10] sm:$0xff]
    %v334 = vld [vmem:[#allocation2 + $0x18] sm:$0xff]
    %v335 = vld [vmem:[#allocation2 + $0x20] sm:$0xff]
    %v336 = vld [vmem:[#allocation2 + $0x28] sm:$0xff]
    %v337 = vld [vmem:[#allocation2 + $0x30] sm:$0xff]
    %v338 = vld [vmem:[#allocation2 + $0x38] sm:$0xff]
    %v339 = vld [vmem:[#allocation2 + $0x40] sm:$0xff]
    %v340 = vld [vmem:[#allocation2 + $0x48] sm:$0xff]
    %v341 = vld [vmem:[#allocation2 + $0x50] sm:$0xff]
    %v342 = vld [vmem:[#allocation2 + $0x58] sm:$0xff]
    %v343 = vld [vmem:[#allocation2 + $0x60] sm:$0xff]
    %v344 = vld [vmem:[#allocation2 + $0x68] sm:$0xff]
    %v345 = vld [vmem:[#allocation2 + $0x70] sm:$0xff]
    %v346 = vld [vmem:[#allocation2 + $0x78] sm:$0xff]
    %v347 = vld [vmem:[%s2] sm:$0x1]
    %v349 = vlaneseq
    %v350 = vshrl.u32 %v349, 7
    %v351 = vsub.s32 0, %v350
    %v352 = vrot.slane %v347, %v351
    %v354 = vadd.f32 %v331, %v352
    %v355 = vadd.f32 %v332, %v352
    %v356 = vadd.f32 %v333, %v352
    %v357 = vadd.f32 %v334, %v352
    %v358 = vadd.f32 %v335, %v352
    %v359 = vadd.f32 %v336, %v352
    %v360 = vadd.f32 %v337, %v352
    %v361 = vadd.f32 %v338, %v352
    %v362 = vadd.f32 %v339, %v352
    %v363 = vadd.f32 %v340, %v352
    %v364 = vadd.f32 %v341, %v352
    %v365 = vadd.f32 %v342, %v352
    %v366 = vadd.f32 %v343, %v352
    %v367 = vadd.f32 %v344, %v352
    %v368 = vadd.f32 %v345, %v352
    %v369 = vadd.f32 %v346, %v352
    %v370 = vpack.c.bf16 %v355, %v354
    %v371 = vpack.c.bf16 %v357, %v356
    %v372 = vpack.c.bf16 %v359, %v358
    %v373 = vpack.c.bf16 %v361, %v360
    %v374 = vpack.c.bf16 %v363, %v362
    %v375 = vpack.c.bf16 %v365, %v364
    %v376 = vpack.c.bf16 %v367, %v366
    %v377 = vpack.c.bf16 %v369, %v368
    %v378 = vld [vmem:[%s3] sm:$0xf]
    %v379 = vld [vmem:[%s3 + $0x4] sm:$0xf]
    %v380 = vld [vmem:[%s3 + $0x8] sm:$0xf]
    %v381 = vld [vmem:[%s3 + $0xc] sm:$0xf]
    %v382 = vld [vmem:[%s3 + $0x10] sm:$0xf]
    %v383 = vld [vmem:[%s3 + $0x14] sm:$0xf]
    %v384 = vld [vmem:[%s3 + $0x18] sm:$0xf]
    %v385 = vld [vmem:[%s3 + $0x1c] sm:$0xf]
    %v386 = vld [vmem:[%s3 + $0x20] sm:$0xf]
    %v387 = vld [vmem:[%s3 + $0x24] sm:$0xf]
    %v388 = vld [vmem:[%s3 + $0x28] sm:$0xf]
    %v389 = vld [vmem:[%s3 + $0x2c] sm:$0xf]
    %v390 = vld [vmem:[%s3 + $0x30] sm:$0xf]
    %v391 = vld [vmem:[%s3 + $0x34] sm:$0xf]
    %v392 = vld [vmem:[%s3 + $0x38] sm:$0xf]
    %v393 = vld [vmem:[%s3 + $0x3c] sm:$0xf]
    %v394 = vld [vmem:[%s4] sm:$0x1]
    %v396 = vlaneseq
    %v397 = vshrl.u32 %v396, 7
    %v398 = vsub.s32 0, %v397
    %v399 = vrot.slane %v394, %v398
    %v417 = vunpack.c.l.b16 %v378
    %v418 = vunpack.c.l.b16 %v379
    %v419 = vunpack.c.l.b16 %v380
    %v420 = vunpack.c.l.b16 %v381
    %v421 = vunpack.c.l.b16 %v382
    %v422 = vunpack.c.l.b16 %v383
    %v423 = vunpack.c.l.b16 %v384
    %v424 = vunpack.c.l.b16 %v385
    %v425 = vunpack.c.l.b16 %v386
    %v426 = vunpack.c.l.b16 %v387
    %v427 = vunpack.c.l.b16 %v388
    %v428 = vunpack.c.l.b16 %v389
    %v429 = vunpack.c.l.b16 %v390
    %v430 = vunpack.c.l.b16 %v391
    %v431 = vunpack.c.l.b16 %v392
    %v432 = vunpack.c.l.b16 %v393
    %v433 = vpack.c.b16 %v418, %v417
    %v434 = vpack.c.b16 %v420, %v419
    %v435 = vpack.c.b16 %v422, %v421
    %v436 = vpack.c.b16 %v424, %v423
    %v437 = vpack.c.b16 %v426, %v425
    %v438 = vpack.c.b16 %v428, %v427
    %v439 = vpack.c.b16 %v430, %v429
    %v440 = vpack.c.b16 %v432, %v431
    %449 = vmatprep.subr.bf16.mxu0 0
    %450 = vmatpush1.bf16.msra.mxu0 %v440
    %451 = vmatprep.subr.bf16.mxu0 0
    %452 = vmatpush1.bf16.msra.mxu0 %v439
    %453 = vmatprep.subr.bf16.mxu0 0
    %454 = vmatpush1.bf16.msra.mxu0 %v438
    %455 = vmatprep.subr.bf16.mxu0 0
    %456 = vmatpush1.bf16.msra.mxu0 %v437
    %457 = vmatprep.subr.bf16.mxu0 0
    %458 = vmatpush1.bf16.msra.mxu0 %v436
    %459 = vmatprep.subr.bf16.mxu0 0
    %460 = vmatpush1.bf16.msra.mxu0 %v435
    %461 = vmatprep.subr.bf16.mxu0 0
    %462 = vmatpush1.bf16.msra.mxu0 %v434
    %463 = vmatprep.subr.bf16.mxu0 0
    %464 = vmatpush1.bf16.msra.mxu0 %v433
    %465 = vmatprep.subr.bf16.mxu0 0
    %466 = vmatpush2.bf16.msra.mxu0 0
    %467 = vmatprep.subr.bf16.mxu0 0
    %468 = vmatpush2.bf16.msra.mxu0 0
    %469 = vmatprep.subr.bf16.mxu0 0
    %470 = vmatpush2.bf16.msra.mxu0 0
    %471 = vmatprep.subr.bf16.mxu0 0
    %472 = vmatpush2.bf16.msra.mxu0 0
    %473 = vmatprep.subr.bf16.mxu0 0
    %474 = vmatpush2.bf16.msra.mxu0 0
    %475 = vmatprep.subr.bf16.mxu0 0
    %476 = vmatpush2.bf16.msra.mxu0 0
    %477 = vmatprep.subr.bf16.mxu0 0
    %478 = vmatpush2.bf16.msra.mxu0 0
    %479 = vmatprep.subr.bf16.mxu0 0
    %480 = vmatpush2.bf16.msra.mxu0 0
    %481 = vmatprep.mubr.bf16.mxu0 0
    %482 = vmatmul.mubr.bf16.gmra.mxu0 %v370
    %v483 = vpop.f32.mrf.mxu0
    %v484 = vadd.f32 %v399, %v483
    %v485 = vpop.f32.mrf.mxu0
    %v486 = vpop.f32.mrf.mxu0
    %v487 = vadd.f32 %v399, %v486
    %v488 = vpop.f32.mrf.mxu0
    %489 = vmatprep.mubr.bf16.mxu0 0
    %490 = vmatmul.mubr.bf16.gmra.mxu0 %v371
    %v491 = vpop.f32.mrf.mxu0
    %v492 = vadd.f32 %v399, %v491
    %v493 = vpop.f32.mrf.mxu0
    %v494 = vpop.f32.mrf.mxu0
    %v495 = vadd.f32 %v399, %v494
    %v496 = vpop.f32.mrf.mxu0
    %497 = vmatprep.mubr.bf16.mxu0 0
    %498 = vmatmul.mubr.bf16.gmra.mxu0 %v372
    %v499 = vpop.f32.mrf.mxu0
    %v500 = vadd.f32 %v399, %v499
    %v501 = vpop.f32.mrf.mxu0
    %v502 = vpop.f32.mrf.mxu0
    %v503 = vadd.f32 %v399, %v502
    %v504 = vpop.f32.mrf.mxu0
    %505 = vmatprep.mubr.bf16.mxu0 0
    %506 = vmatmul.mubr.bf16.gmra.mxu0 %v373
    %v507 = vpop.f32.mrf.mxu0
    %v508 = vadd.f32 %v399, %v507
    %v509 = vpop.f32.mrf.mxu0
    %v510 = vpop.f32.mrf.mxu0
    %v511 = vadd.f32 %v399, %v510
    %v512 = vpop.f32.mrf.mxu0
    %513 = vmatprep.mubr.bf16.mxu0 0
    %514 = vmatmul.mubr.bf16.gmra.mxu0 %v374
    %v515 = vpop.f32.mrf.mxu0
    %v516 = vadd.f32 %v399, %v515
    %v517 = vpop.f32.mrf.mxu0
    %v518 = vpop.f32.mrf.mxu0
    %v519 = vadd.f32 %v399, %v518
    %v520 = vpop.f32.mrf.mxu0
    %521 = vmatprep.mubr.bf16.mxu0 0
    %522 = vmatmul.mubr.bf16.gmra.mxu0 %v375
    %v523 = vpop.f32.mrf.mxu0
    %v524 = vadd.f32 %v399, %v523
    %v525 = vpop.f32.mrf.mxu0
    %v526 = vpop.f32.mrf.mxu0
    %v527 = vadd.f32 %v399, %v526
    %v528 = vpop.f32.mrf.mxu0
    %529 = vmatprep.mubr.bf16.mxu0 0
    %530 = vmatmul.mubr.bf16.gmra.mxu0 %v376
    %v531 = vpop.f32.mrf.mxu0
    %v532 = vadd.f32 %v399, %v531
    %v533 = vpop.f32.mrf.mxu0
    %v534 = vpop.f32.mrf.mxu0
    %v535 = vadd.f32 %v399, %v534
    %v536 = vpop.f32.mrf.mxu0
    %537 = vmatprep.mubr.bf16.mxu0 0
    %538 = vmatmul.mubr.bf16.gmra.mxu0 %v377
    %v539 = vpop.f32.mrf.mxu0
    %v540 = vadd.f32 %v399, %v539
    %v541 = vpop.f32.mrf.mxu0
    %v542 = vpop.f32.mrf.mxu0
    %v543 = vadd.f32 %v399, %v542
    %v544 = vpop.f32.mrf.mxu0
    %545 = vdwg.mxu0
    %546 = vadd.xlane.f32.xlu0 %v484
    %v547 = vpop.xlane.xlu0 %546
    %548 = vadd.xlane.f32.xlu0 %v487
    %v549 = vpop.xlane.xlu0 %548
    %550 = vadd.xlane.f32.xlu0 %v492
    %v551 = vpop.xlane.xlu0 %550
    %552 = vadd.xlane.f32.xlu0 %v495
    %v553 = vpop.xlane.xlu0 %552
    %554 = vadd.xlane.f32.xlu0 %v500
    %v555 = vpop.xlane.xlu0 %554
    %556 = vadd.xlane.f32.xlu0 %v503
    %v557 = vpop.xlane.xlu0 %556
    %558 = vadd.xlane.f32.xlu0 %v508
    %v559 = vpop.xlane.xlu0 %558
    %560 = vadd.xlane.f32.xlu0 %v511
    %v561 = vpop.xlane.xlu0 %560
    %562 = vadd.xlane.f32.xlu0 %v516
    %v563 = vpop.xlane.xlu0 %562
    %564 = vadd.xlane.f32.xlu0 %v519
    %v565 = vpop.xlane.xlu0 %564
    %566 = vadd.xlane.f32.xlu0 %v524
    %v567 = vpop.xlane.xlu0 %566
    %568 = vadd.xlane.f32.xlu0 %v527
    %v569 = vpop.xlane.xlu0 %568
    %570 = vadd.xlane.f32.xlu0 %v532
    %v571 = vpop.xlane.xlu0 %570
    %572 = vadd.xlane.f32.xlu0 %v535
    %v573 = vpop.xlane.xlu0 %572
    %574 = vadd.xlane.f32.xlu0 %v540
    %v575 = vpop.xlane.xlu0 %574
    %576 = vadd.xlane.f32.xlu0 %v543
    %v577 = vpop.xlane.xlu0 %576
    %v578 = vmul.f32 %v484, %v484
    %v579 = vmul.f32 %v487, %v487
    %v580 = vmul.f32 %v492, %v492
    %v581 = vmul.f32 %v495, %v495
    %v582 = vmul.f32 %v500, %v500
    %v583 = vmul.f32 %v503, %v503
    %v584 = vmul.f32 %v508, %v508
    %v585 = vmul.f32 %v511, %v511
    %v586 = vmul.f32 %v516, %v516
    %v587 = vmul.f32 %v519, %v519
    %v588 = vmul.f32 %v524, %v524
    %v589 = vmul.f32 %v527, %v527
    %v590 = vmul.f32 %v532, %v532
    %v591 = vmul.f32 %v535, %v535
    %v592 = vmul.f32 %v540, %v540
    %v593 = vmul.f32 %v543, %v543
    %594 = vadd.xlane.f32.xlu0 %v578
    %v595 = vpop.xlane.xlu0 %594
    %596 = vadd.xlane.f32.xlu0 %v579
    %v597 = vpop.xlane.xlu0 %596
    %598 = vadd.xlane.f32.xlu0 %v580
    %v599 = vpop.xlane.xlu0 %598
    %600 = vadd.xlane.f32.xlu0 %v581
    %v601 = vpop.xlane.xlu0 %600
    %602 = vadd.xlane.f32.xlu0 %v582
    %v603 = vpop.xlane.xlu0 %602
    %604 = vadd.xlane.f32.xlu0 %v583
    %v605 = vpop.xlane.xlu0 %604
    %606 = vadd.xlane.f32.xlu0 %v584
    %v607 = vpop.xlane.xlu0 %606
    %608 = vadd.xlane.f32.xlu0 %v585
    %v609 = vpop.xlane.xlu0 %608
    %610 = vadd.xlane.f32.xlu0 %v586
    %v611 = vpop.xlane.xlu0 %610
    %612 = vadd.xlane.f32.xlu0 %v587
    %v613 = vpop.xlane.xlu0 %612
    %614 = vadd.xlane.f32.xlu0 %v588
    %v615 = vpop.xlane.xlu0 %614
    %616 = vadd.xlane.f32.xlu0 %v589
    %v617 = vpop.xlane.xlu0 %616
    %618 = vadd.xlane.f32.xlu0 %v590
    %v619 = vpop.xlane.xlu0 %618
    %620 = vadd.xlane.f32.xlu0 %v591
    %v621 = vpop.xlane.xlu0 %620
    %622 = vadd.xlane.f32.xlu0 %v592
    %v623 = vpop.xlane.xlu0 %622
    %624 = vadd.xlane.f32.xlu0 %v593
    %v625 = vpop.xlane.xlu0 %624
    %v626 = vmul.f32 %v547, 0.03125
    %v627 = vmul.f32 %v549, 0.03125
    %v628 = vmul.f32 %v551, 0.03125
    %v629 = vmul.f32 %v553, 0.03125
    %v630 = vmul.f32 %v555, 0.03125
    %v631 = vmul.f32 %v557, 0.03125
    %v632 = vmul.f32 %v559, 0.03125
    %v633 = vmul.f32 %v561, 0.03125
    %v634 = vmul.f32 %v563, 0.03125
    %v635 = vmul.f32 %v565, 0.03125
    %v636 = vmul.f32 %v567, 0.03125
    %v637 = vmul.f32 %v569, 0.03125
    %v638 = vmul.f32 %v571, 0.03125
    %v639 = vmul.f32 %v573, 0.03125
    %v640 = vmul.f32 %v575, 0.03125
    %v641 = vmul.f32 %v577, 0.03125
    %v642 = vmul.f32 %v595, 0.03125
    %v643 = vmul.f32 %v597, 0.03125
    %v644 = vmul.f32 %v599, 0.03125
    %v645 = vmul.f32 %v601, 0.03125
    %v646 = vmul.f32 %v603, 0.03125
    %v647 = vmul.f32 %v605, 0.03125
    %v648 = vmul.f32 %v607, 0.03125
    %v649 = vmul.f32 %v609, 0.03125
    %v650 = vmul.f32 %v611, 0.03125
    %v651 = vmul.f32 %v613, 0.03125
    %v652 = vmul.f32 %v615, 0.03125
    %v653 = vmul.f32 %v617, 0.03125
    %v654 = vmul.f32 %v619, 0.03125
    %v655 = vmul.f32 %v621, 0.03125
    %v656 = vmul.f32 %v623, 0.03125
    %v657 = vmul.f32 %v625, 0.03125
    %v658 = vmul.f32 %v626, %v626
    %v659 = vmul.f32 %v627, %v627
    %v660 = vmul.f32 %v628, %v628
    %v661 = vmul.f32 %v629, %v629
    %v662 = vmul.f32 %v630, %v630
    %v663 = vmul.f32 %v631, %v631
    %v664 = vmul.f32 %v632, %v632
    %v665 = vmul.f32 %v633, %v633
    %v666 = vmul.f32 %v634, %v634
    %v667 = vmul.f32 %v635, %v635
    %v668 = vmul.f32 %v636, %v636
    %v669 = vmul.f32 %v637, %v637
    %v670 = vmul.f32 %v638, %v638
    %v671 = vmul.f32 %v639, %v639
    %v672 = vmul.f32 %v640, %v640
    %v673 = vmul.f32 %v641, %v641
    %v674 = vsub.f32 %v642, %v658
    %v675 = vsub.f32 %v643, %v659
    %v676 = vsub.f32 %v644, %v660
    %v677 = vsub.f32 %v645, %v661
    %v678 = vsub.f32 %v646, %v662
    %v679 = vsub.f32 %v647, %v663
    %v680 = vsub.f32 %v648, %v664
    %v681 = vsub.f32 %v649, %v665
    %v682 = vsub.f32 %v650, %v666
    %v683 = vsub.f32 %v651, %v667
    %v684 = vsub.f32 %v652, %v668
    %v685 = vsub.f32 %v653, %v669
    %v686 = vsub.f32 %v654, %v670
    %v687 = vsub.f32 %v655, %v671
    %v688 = vsub.f32 %v656, %v672
    %v689 = vsub.f32 %v657, %v673
    %v690 = vsub.f32 %v484, %v626
    %v691 = vsub.f32 %v487, %v627
    %v692 = vsub.f32 %v492, %v628
    %v693 = vsub.f32 %v495, %v629
    %v694 = vsub.f32 %v500, %v630
    %v695 = vsub.f32 %v503, %v631
    %v696 = vsub.f32 %v508, %v632
    %v697 = vsub.f32 %v511, %v633
    %v698 = vsub.f32 %v516, %v634
    %v699 = vsub.f32 %v519, %v635
    %v700 = vsub.f32 %v524, %v636
    %v701 = vsub.f32 %v527, %v637
    %v702 = vsub.f32 %v532, %v638
    %v703 = vsub.f32 %v535, %v639
    %v704 = vsub.f32 %v540, %v640
    %v705 = vsub.f32 %v543, %v641
    %v706 = vadd.f32 %v674, 1e-05
    %v707 = vadd.f32 %v675, 1e-05
    %v708 = vadd.f32 %v676, 1e-05
    %v709 = vadd.f32 %v677, 1e-05
    %v710 = vadd.f32 %v678, 1e-05
    %v711 = vadd.f32 %v679, 1e-05
    %v712 = vadd.f32 %v680, 1e-05
    %v713 = vadd.f32 %v681, 1e-05
    %v714 = vadd.f32 %v682, 1e-05
    %v715 = vadd.f32 %v683, 1e-05
    %v716 = vadd.f32 %v684, 1e-05
    %v717 = vadd.f32 %v685, 1e-05
    %v718 = vadd.f32 %v686, 1e-05
    %v719 = vadd.f32 %v687, 1e-05
    %v720 = vadd.f32 %v688, 1e-05
    %v721 = vadd.f32 %v689, 1e-05
    %v722 = vrsqrt.pop %v706
    %v723 = vrsqrt.pop %v707
    %v724 = vrsqrt.pop %v708
    %v725 = vrsqrt.pop %v709
    %v726 = vrsqrt.pop %v710
    %v727 = vrsqrt.pop %v711
    %v728 = vrsqrt.pop %v712
    %v729 = vrsqrt.pop %v713
    %v730 = vrsqrt.pop %v714
    %v731 = vrsqrt.pop %v715
    %v732 = vrsqrt.pop %v716
    %v733 = vrsqrt.pop %v717
    %v734 = vrsqrt.pop %v718
    %v735 = vrsqrt.pop %v719
    %v736 = vrsqrt.pop %v720
    %v737 = vrsqrt.pop %v721
    %v738 = vmul.f32 %v690, %v722
    %v739 = vmul.f32 %v691, %v723
    %v740 = vmul.f32 %v692, %v724
    %v741 = vmul.f32 %v693, %v725
    %v742 = vmul.f32 %v694, %v726
    %v743 = vmul.f32 %v695, %v727
    %v744 = vmul.f32 %v696, %v728
    %v745 = vmul.f32 %v697, %v729
    %v746 = vmul.f32 %v698, %v730
    %v747 = vmul.f32 %v699, %v731
    %v748 = vmul.f32 %v700, %v732
    %v749 = vmul.f32 %v701, %v733
    %v750 = vmul.f32 %v702, %v734
    %v751 = vmul.f32 %v703, %v735
    %v752 = vmul.f32 %v704, %v736
    %v753 = vmul.f32 %v705, %v737
    %v754 = vld [vmem:[%s5] sm:$0x1]
    %v756 = vlaneseq
    %v757 = vshrl.u32 %v756, 7
    %v758 = vsub.s32 0, %v757
    %v759 = vrot.slane %v754, %v758
    %v761 = vmul.f32 %v738, %v759
    %v762 = vmul.f32 %v739, %v759
    %v763 = vmul.f32 %v740, %v759
    %v764 = vmul.f32 %v741, %v759
    %v765 = vmul.f32 %v742, %v759
    %v766 = vmul.f32 %v743, %v759
    %v767 = vmul.f32 %v744, %v759
    %v768 = vmul.f32 %v745, %v759
    %v769 = vmul.f32 %v746, %v759
    %v770 = vmul.f32 %v747, %v759
    %v771 = vmul.f32 %v748, %v759
    %v772 = vmul.f32 %v749, %v759
    %v773 = vmul.f32 %v750, %v759
    %v774 = vmul.f32 %v751, %v759
    %v775 = vmul.f32 %v752, %v759
    %v776 = vmul.f32 %v753, %v759
    %v777 = vld [vmem:[%s6] sm:$0x1]
    %v779 = vlaneseq
    %v780 = vshrl.u32 %v779, 7
    %v781 = vsub.s32 0, %v780
    %v782 = vrot.slane %v777, %v781
    %v784 = vadd.f32 %v761, %v782
    %v785 = vadd.f32 %v762, %v782
    %v786 = vadd.f32 %v763, %v782
    %v787 = vadd.f32 %v764, %v782
    %v788 = vadd.f32 %v765, %v782
    %v789 = vadd.f32 %v766, %v782
    %v790 = vadd.f32 %v767, %v782
    %v791 = vadd.f32 %v768, %v782
    %v792 = vadd.f32 %v769, %v782
    %v793 = vadd.f32 %v770, %v782
    %v794 = vadd.f32 %v771, %v782
    %v795 = vadd.f32 %v772, %v782
    %v796 = vadd.f32 %v773, %v782
    %v797 = vadd.f32 %v774, %v782
    %v798 = vadd.f32 %v775, %v782
    %v799 = vadd.f32 %v776, %v782
    %v800 = vmax.f32 %v784, 0.0
    %v801 = vmax.f32 %v785, 0.0
    %v802 = vmax.f32 %v786, 0.0
    %v803 = vmax.f32 %v787, 0.0
    %v804 = vmax.f32 %v788, 0.0
    %v805 = vmax.f32 %v789, 0.0
    %v806 = vmax.f32 %v790, 0.0
    %v807 = vmax.f32 %v791, 0.0
    %v808 = vmax.f32 %v792, 0.0
    %v809 = vmax.f32 %v793, 0.0
    %v810 = vmax.f32 %v794, 0.0
    %v811 = vmax.f32 %v795, 0.0
    %v812 = vmax.f32 %v796, 0.0
    %v813 = vmax.f32 %v797, 0.0
    %v814 = vmax.f32 %v798, 0.0
    %v815 = vmax.f32 %v799, 0.0
    %v816 = vpack.c.bf16 %v801, %v800
    %v817 = vpack.c.bf16 %v803, %v802
    %v818 = vpack.c.bf16 %v805, %v804
    %v819 = vpack.c.bf16 %v807, %v806
    %v820 = vpack.c.bf16 %v809, %v808
    %v821 = vpack.c.bf16 %v811, %v810
    %v822 = vpack.c.bf16 %v813, %v812
    %v823 = vpack.c.bf16 %v815, %v814
    %v824 = vld [vmem:[%s7] sm:$0xf]
    %v825 = vld [vmem:[%s7 + $0x4] sm:$0xf]
    %v826 = vld [vmem:[%s7 + $0x8] sm:$0xf]
    %v827 = vld [vmem:[%s7 + $0xc] sm:$0xf]
    %v828 = vld [vmem:[%s7 + $0x10] sm:$0xf]
    %v829 = vld [vmem:[%s7 + $0x14] sm:$0xf]
    %v830 = vld [vmem:[%s7 + $0x18] sm:$0xf]
    %v831 = vld [vmem:[%s7 + $0x1c] sm:$0xf]
    %v832 = vld [vmem:[%s7 + $0x20] sm:$0xf]
    %v833 = vld [vmem:[%s7 + $0x24] sm:$0xf]
    %v834 = vld [vmem:[%s7 + $0x28] sm:$0xf]
    %v835 = vld [vmem:[%s7 + $0x2c] sm:$0xf]
    %v836 = vld [vmem:[%s7 + $0x30] sm:$0xf]
    %v837 = vld [vmem:[%s7 + $0x34] sm:$0xf]
    %v838 = vld [vmem:[%s7 + $0x38] sm:$0xf]
    %v839 = vld [vmem:[%s7 + $0x3c] sm:$0xf]
    %v856 = vunpack.c.l.b16 %v824
    %v857 = vunpack.c.l.b16 %v825
    %v858 = vunpack.c.l.b16 %v826
    %v859 = vunpack.c.l.b16 %v827
    %v860 = vunpack.c.l.b16 %v828
    %v861 = vunpack.c.l.b16 %v829
    %v862 = vunpack.c.l.b16 %v830
    %v863 = vunpack.c.l.b16 %v831
    %v864 = vunpack.c.l.b16 %v832
    %v865 = vunpack.c.l.b16 %v833
    %v866 = vunpack.c.l.b16 %v834
    %v867 = vunpack.c.l.b16 %v835
    %v868 = vunpack.c.l.b16 %v836
    %v869 = vunpack.c.l.b16 %v837
    %v870 = vunpack.c.l.b16 %v838
    %v871 = vunpack.c.l.b16 %v839
    %v872 = vpack.c.b16 %v857, %v856
    %v873 = vpack.c.b16 %v859, %v858
    %v874 = vpack.c.b16 %v861, %v860
    %v875 = vpack.c.b16 %v863, %v862
    %v876 = vpack.c.b16 %v865, %v864
    %v877 = vpack.c.b16 %v867, %v866
    %v878 = vpack.c.b16 %v869, %v868
    %v879 = vpack.c.b16 %v871, %v870
    %888 = vmatprep.subr.bf16.mxu0 0
    %889 = vmatpush1.bf16.msra.mxu0 %v879
    %890 = vmatprep.subr.bf16.mxu0 0
    %891 = vmatpush1.bf16.msra.mxu0 %v878
    %892 = vmatprep.subr.bf16.mxu0 0
    %893 = vmatpush1.bf16.msra.mxu0 %v877
    %894 = vmatprep.subr.bf16.mxu0 0
    %895 = vmatpush1.bf16.msra.mxu0 %v876
    %896 = vmatprep.subr.bf16.mxu0 0
    %897 = vmatpush1.bf16.msra.mxu0 %v875
    %898 = vmatprep.subr.bf16.mxu0 0
    %899 = vmatpush1.bf16.msra.mxu0 %v874
    %900 = vmatprep.subr.bf16.mxu0 0
    %901 = vmatpush1.bf16.msra.mxu0 %v873
    %902 = vmatprep.subr.bf16.mxu0 0
    %903 = vmatpush1.bf16.msra.mxu0 %v872
    %904 = vmatprep.subr.bf16.mxu0 0
    %905 = vmatpush2.bf16.msra.mxu0 0
    %906 = vmatprep.subr.bf16.mxu0 0
    %907 = vmatpush2.bf16.msra.mxu0 0
    %908 = vmatprep.subr.bf16.mxu0 0
    %909 = vmatpush2.bf16.msra.mxu0 0
    %910 = vmatprep.subr.bf16.mxu0 0
    %911 = vmatpush2.bf16.msra.mxu0 0
    %912 = vmatprep.subr.bf16.mxu0 0
    %913 = vmatpush2.bf16.msra.mxu0 0
    %914 = vmatprep.subr.bf16.mxu0 0
    %915 = vmatpush2.bf16.msra.mxu0 0
    %916 = vmatprep.subr.bf16.mxu0 0
    %917 = vmatpush2.bf16.msra.mxu0 0
    %918 = vmatprep.subr.bf16.mxu0 0
    %919 = vmatpush2.bf16.msra.mxu0 0
    %920 = vmatprep.mubr.bf16.mxu0 0
    %921 = vmatmul.mubr.bf16.gmra.mxu0 %v816
    %v922 = vpop.f32.mrf.mxu0
    %v923 = vadd.f32 0.0, %v922
    %v924 = vpop.f32.mrf.mxu0
    %v925 = vpop.f32.mrf.mxu0
    %v926 = vadd.f32 0.0, %v925
    %v927 = vpop.f32.mrf.mxu0
    %928 = vmatprep.mubr.bf16.mxu0 0
    %929 = vmatmul.mubr.bf16.gmra.mxu0 %v817
    %v930 = vpop.f32.mrf.mxu0
    %v931 = vadd.f32 0.0, %v930
    %v932 = vpop.f32.mrf.mxu0
    %v933 = vpop.f32.mrf.mxu0
    %v934 = vadd.f32 0.0, %v933
    %v935 = vpop.f32.mrf.mxu0
    %936 = vmatprep.mubr.bf16.mxu0 0
    %937 = vmatmul.mubr.bf16.gmra.mxu0 %v818
    %v938 = vpop.f32.mrf.mxu0
    %v939 = vadd.f32 0.0, %v938
    %v940 = vpop.f32.mrf.mxu0
    %v941 = vpop.f32.mrf.mxu0
    %v942 = vadd.f32 0.0, %v941
    %v943 = vpop.f32.mrf.mxu0
    %944 = vmatprep.mubr.bf16.mxu0 0
    %945 = vmatmul.mubr.bf16.gmra.mxu0 %v819
    %v946 = vpop.f32.mrf.mxu0
    %v947 = vadd.f32 0.0, %v946
    %v948 = vpop.f32.mrf.mxu0
    %v949 = vpop.f32.mrf.mxu0
    %v950 = vadd.f32 0.0, %v949
    %v951 = vpop.f32.mrf.mxu0
    %952 = vmatprep.mubr.bf16.mxu0 0
    %953 = vmatmul.mubr.bf16.gmra.mxu0 %v820
    %v954 = vpop.f32.mrf.mxu0
    %v955 = vadd.f32 0.0, %v954
    %v956 = vpop.f32.mrf.mxu0
    %v957 = vpop.f32.mrf.mxu0
    %v958 = vadd.f32 0.0, %v957
    %v959 = vpop.f32.mrf.mxu0
    %960 = vmatprep.mubr.bf16.mxu0 0
    %961 = vmatmul.mubr.bf16.gmra.mxu0 %v821
    %v962 = vpop.f32.mrf.mxu0
    %v963 = vadd.f32 0.0, %v962
    %v964 = vpop.f32.mrf.mxu0
    %v965 = vpop.f32.mrf.mxu0
    %v966 = vadd.f32 0.0, %v965
    %v967 = vpop.f32.mrf.mxu0
    %968 = vmatprep.mubr.bf16.mxu0 0
    %969 = vmatmul.mubr.bf16.gmra.mxu0 %v822
    %v970 = vpop.f32.mrf.mxu0
    %v971 = vadd.f32 0.0, %v970
    %v972 = vpop.f32.mrf.mxu0
    %v973 = vpop.f32.mrf.mxu0
    %v974 = vadd.f32 0.0, %v973
    %v975 = vpop.f32.mrf.mxu0
    %976 = vmatprep.mubr.bf16.mxu0 0
    %977 = vmatmul.mubr.bf16.gmra.mxu0 %v823
    %v978 = vpop.f32.mrf.mxu0
    %v979 = vadd.f32 0.0, %v978
    %v980 = vpop.f32.mrf.mxu0
    %v981 = vpop.f32.mrf.mxu0
    %v982 = vadd.f32 0.0, %v981
    %v983 = vpop.f32.mrf.mxu0
    %984 = vdwg.mxu0
    %v985 = vpack.c.bf16 %v926, %v923
    %v986 = vpack.c.bf16 %v934, %v931
    %v987 = vpack.c.bf16 %v942, %v939
    %v988 = vpack.c.bf16 %v950, %v947
    %v989 = vpack.c.bf16 %v958, %v955
    %v990 = vpack.c.bf16 %v966, %v963
    %v991 = vpack.c.bf16 %v974, %v971
    %v992 = vpack.c.bf16 %v982, %v979
    %v1001 = vunpack.c.l.b16 %v985
    %v1002 = vunpack.c.h.b16 %v985
    %v1003 = vunpack.c.l.b16 %v986
    %v1004 = vunpack.c.h.b16 %v986
    %v1005 = vunpack.c.l.b16 %v987
    %v1006 = vunpack.c.h.b16 %v987
    %v1007 = vunpack.c.l.b16 %v988
    %v1008 = vunpack.c.h.b16 %v988
    %v1009 = vunpack.c.l.b16 %v989
    %v1010 = vunpack.c.h.b16 %v989
    %v1011 = vunpack.c.l.b16 %v990
    %v1012 = vunpack.c.h.b16 %v990
    %v1013 = vunpack.c.l.b16 %v991
    %v1014 = vunpack.c.h.b16 %v991
    %v1015 = vunpack.c.l.b16 %v992
    %v1016 = vunpack.c.h.b16 %v992
    %v1017 = vpack.c.b16 %v1001, %v1001
    %v1018 = vpack.c.b16 %v1002, %v1002
    %v1019 = vpack.c.b16 %v1003, %v1003
    %v1020 = vpack.c.b16 %v1004, %v1004
    %v1021 = vpack.c.b16 %v1005, %v1005
    %v1022 = vpack.c.b16 %v1006, %v1006
    %v1023 = vpack.c.b16 %v1007, %v1007
    %v1024 = vpack.c.b16 %v1008, %v1008
    %v1025 = vpack.c.b16 %v1009, %v1009
    %v1026 = vpack.c.b16 %v1010, %v1010
    %v1027 = vpack.c.b16 %v1011, %v1011
    %v1028 = vpack.c.b16 %v1012, %v1012
    %v1029 = vpack.c.b16 %v1013, %v1013
    %v1030 = vpack.c.b16 %v1014, %v1014
    %v1031 = vpack.c.b16 %v1015, %v1015
    %v1032 = vpack.c.b16 %v1016, %v1016
    %1049 = vst [vmem:[%s8] sm:$0xf] %v1017
    %1050 = vst [vmem:[%s8 + $0x4] sm:$0xf] %v1018
    %1051 = vst [vmem:[%s8 + $0x8] sm:$0xf] %v1019
    %1052 = vst [vmem:[%s8 + $0xc] sm:$0xf] %v1020
    %1053 = vst [vmem:[%s8 + $0x10] sm:$0xf] %v1021
    %1054 = vst [vmem:[%s8 + $0x14] sm:$0xf] %v1022
    %1055 = vst [vmem:[%s8 + $0x18] sm:$0xf] %v1023
    %1056 = vst [vmem:[%s8 + $0x1c] sm:$0xf] %v1024
    %1057 = vst [vmem:[%s8 + $0x20] sm:$0xf] %v1025
    %1058 = vst [vmem:[%s8 + $0x24] sm:$0xf] %v1026
    %1059 = vst [vmem:[%s8 + $0x28] sm:$0xf] %v1027
    %1060 = vst [vmem:[%s8 + $0x2c] sm:$0xf] %v1028
    %1061 = vst [vmem:[%s8 + $0x30] sm:$0xf] %v1029
    %1062 = vst [vmem:[%s8 + $0x34] sm:$0xf] %v1030
    %1063 = vst [vmem:[%s8 + $0x38] sm:$0xf] %v1031
    %1064 = vst [vmem:[%s8 + $0x3c] sm:$0xf] %v1032
  $region41: #{dysat_gcn_forward.4} parent=0 // pred_fallthru
    _
  // Predicated region
  $region42: #{dysat_gcn_forward.4} parent=0 // pred_check
    _
  $region43: #{dysat_gcn_forward.4} parent=0 // pred_check_branch
    %1066 = sbr.rel (0) target = $region45
  $region44: #{dysat_gcn_forward.4} parent=0 // pred_region
    _
  $region45: #{dysat_gcn_forward.4} parent=0 // pred_fallthru
    _
  // Predicated region
  $region46: #{dysat_gcn_forward.4} parent=0 // pred_check
    _
  $region47: #{dysat_gcn_forward.4} parent=0 // pred_check_branch
    %1068 = sbr.rel (0) target = $region49
  $region48: #{dysat_gcn_forward.4} parent=0 // pred_region
    _
  $region49: #{dysat_gcn_forward.4} parent=0 // pred_fallthru
    _

</llo_original>
